<compile_context>
chip_gen: v6e
topology: v6e:2x2x1
jax: 0.10.0
libtpu: 0.0.40
codegen_flags: <defaults>
</compile_context>

<pallas_src>
import functools

import jax
import jax.numpy as jnp
import numpy as np
from jax.experimental import pallas as pl
from jax.experimental.pallas import tpu as pltpu


def spatial_attention_kernel(x_ref, p_ref, o_ref, *, n_heads):
    B, E, T = x_ref.shape          # (batch, n_sources == embed_dim, time)
    H = n_heads
    S = T                          # key length == query length (self-attention)

    # ---- unpack the single parameter slab (all static slices, no extra DMAs) ----
    P = p_ref[...]
    wqkv_t = P[0:E, :]                       # (E, 3E)  [Wq^T * 1/sqrt(hd) | Wk^T | Wv^T]
    wo_t   = P[E:2 * E, 0:E]                 # (E, E)   out_proj.weight^T
    msum   = P[2 * E:3 * E, 0:H]             # (E, H)   0/1 head-block sum matrix
    mdup   = P[3 * E:3 * E + H, 0:E]         # (H, E)   0/1 head -> channel duplication matrix
    r = 3 * E + H
    bqkv   = P[r:r + 1, :]                   # (1, 3E)  [bq*scale | bk | bv]
    bo     = P[r + 1:r + 2, 0:E]             # (1, E)   out_proj.bias
    gamma  = P[r + 2:r + 3, 0:E]             # (1, E)   LayerNorm weight
    beta   = P[r + 3:r + 4, 0:E]             # (1, E)   LayerNorm bias

    x = x_ref[...].astype(jnp.float32)       # (B, E, T), native module layout

    # ---- fold the module's transpose into the kernel: (B, E, T) -> (B*T, E) ----
    x2 = jnp.concatenate([x[b].T for b in range(B)], axis=0)        # (B*T, E)

    # ---- fused QKV projection (one MXU pass; scale folded into the Q block host-side) ----
    qkv = jnp.dot(x2, wqkv_t, preferred_element_type=jnp.float32) + bqkv   # (B*T, 3E)
    q2 = qkv[:, 0:E]                          # (B*T, E)   already scaled by 1/sqrt(hd)
    k2 = qkv[:, E:2 * E]                      # (B*T, E)
    v2 = qkv[:, 2 * E:3 * E]                  # (B*T, E)

    # ---- all-head score products: s2[b*T+t, s, e] = q[b,t,e] * k[b,s,e]  (pure VPU) ----
    rows = []
    for b in range(B):
        k_b = k2[b * T:(b + 1) * T, :]        # (S, E)
        for t in range(T):
            n = b * T + t
            rows.append(q2[n:n + 1, :] * k_b)  # (S, E) broadcast multiply
    s2 = jnp.stack(rows, axis=0)               # (B*T, S, E)

    # ---- per-head reduction over head_dim-wide channel blocks via a tiny 0/1 matmul ----
    sh = jnp.dot(s2.reshape(B * T * S, E), msum,
                 preferred_element_type=jnp.float32).reshape(B * T, S, H)   # (B*T, S, H)

    # ---- one softmax over keys for all (batch, query, head) at once ----
    m = jnp.max(sh, axis=1, keepdims=True)                 # (B*T, 1, H)
    p = jnp.exp(sh - m)
    denom = jnp.sum(p, axis=1, keepdims=True)              # (B*T, 1, H)
    p = p * pl.reciprocal(denom, approx=True)              # (B*T, S, H)  (EUP vrcp)

    # ---- duplicate head probabilities back onto their channel lanes ----
    pd = jnp.dot(p.reshape(B * T * S, H), mdup,
                 preferred_element_type=jnp.float32).reshape(B * T, S, E)   # (B*T, S, E)

    # ---- context: ctx[n, e] = sum_s pd[n, s, e] * v[b(n), s, e]  (VPU mul + sublane reduce) ----
    ctx_rows = []
    for b in range(B):
        v_b = v2[b * T:(b + 1) * T, :]                     # (S, E)
        for t in range(T):
            n = b * T + t
            ctx_rows.append(jnp.sum(pd[n] * v_b, axis=0, keepdims=True))   # (1, E)
    ctx = jnp.concatenate(ctx_rows, axis=0)                # (B*T, E), heads already concatenated

    # ---- single output projection + bias ----
    attn = jnp.dot(ctx, wo_t, preferred_element_type=jnp.float32) + bo     # (B*T, E)

    # ---- residual + LayerNorm over the n_sources dim (eps = 1e-5, PyTorch default) ----
    y = x2 + attn
    mu = jnp.mean(y, axis=-1, keepdims=True)
    yc = y - mu
    var = jnp.mean(yc * yc, axis=-1, keepdims=True)
    out2 = (yc * jax.lax.rsqrt(var + 1e-5)) * gamma + beta                 # (B*T, E)

    # ---- write back in the module's native (B, n_sources, T) layout ----
    o_ref[...] = jnp.stack([out2[b * T:(b + 1) * T, :].T for b in range(B)],
                           axis=0).astype(o_ref.dtype)


def spatial_attention(x, packed_params, *, n_heads):
    """x: (B, n_sources, T) float32 -> (B, n_sources, T) float32 (no wrapper-side relayout)."""
    B, E, T = x.shape
    vmem = pl.BlockSpec(memory_space=pltpu.MemorySpace.VMEM)
    return pl.pallas_call(
        functools.partial(spatial_attention_kernel, n_heads=n_heads),
        out_shape=jax.ShapeDtypeStruct((B, E, T), jnp.float32),
        in_specs=[vmem, vmem],
        out_specs=vmem,
    )(x, packed_params)


def init_params(key, n_sources):
    """Deterministic synthetic init matching nn.MultiheadAttention / nn.LayerNorm shapes."""
    E = n_sources
    ks = jax.random.split(key, 6)
    in_proj_w = jax.random.normal(ks[0], (3 * E, E), jnp.float32) * (1.0 / np.sqrt(E))
    in_proj_b = jax.random.normal(ks[1], (3 * E,), jnp.float32) * 0.02
    out_w = jax.random.normal(ks[2], (E, E), jnp.float32) * (1.0 / np.sqrt(E))
    out_b = jax.random.normal(ks[3], (E,), jnp.float32) * 0.02
    ln_g = 1.0 + 0.1 * jax.random.normal(ks[4], (E,), jnp.float32)
    ln_b = 0.05 * jax.random.normal(ks[5], (E,), jnp.float32)
    return {
        "wq": in_proj_w[:E], "wk": in_proj_w[E:2 * E], "wv": in_proj_w[2 * E:],
        "bq": in_proj_b[:E].reshape(1, E),
        "bk": in_proj_b[E:2 * E].reshape(1, E),
        "bv": in_proj_b[2 * E:].reshape(1, E),
        "wo": out_w, "bo": out_b.reshape(1, E),
        "ln_g": ln_g.reshape(1, E), "ln_b": ln_b.reshape(1, E),
    }


def pack_params(raw, n_heads):
    """Host-side fusion: pre-transpose, fold the 1/sqrt(hd) scale into the Q block, fuse the
    q/k/v projections, build the 0/1 head-sum / head-duplication matrices, and pack everything
    into one (3E + H + 4, 3E) f32 slab so the kernel has a single parameter input."""
    E = raw["wq"].shape[0]
    H = n_heads
    hd = E // H
    scale = jnp.float32(1.0 / np.sqrt(hd))
    C = 3 * E

    wqkv_t = jnp.concatenate([raw["wq"].T * scale, raw["wk"].T, raw["wv"].T], axis=1)  # (E, 3E)
    bqkv = jnp.concatenate([raw["bq"] * scale, raw["bk"], raw["bv"]], axis=1)          # (1, 3E)
    wo_t = raw["wo"].T                                                                  # (E, E)

    e_idx = jnp.arange(E)[:, None]
    h_idx = jnp.arange(H)[None, :]
    msum = (e_idx // hd == h_idx).astype(jnp.float32)                                   # (E, H)
    mdup = msum.T                                                                        # (H, E)

    def padc(a):
        return jnp.pad(a, ((0, 0), (0, C - a.shape[1])))

    packed = jnp.concatenate([
        wqkv_t,                  # rows [0, E)
        padc(wo_t),              # rows [E, 2E)
        padc(msum),              # rows [2E, 3E)
        padc(mdup),              # rows [3E, 3E+H)
        bqkv,                    # row  3E+H
        padc(raw["bo"]),         # row  3E+H+1
        padc(raw["ln_g"]),       # row  3E+H+2
        padc(raw["ln_b"]),       # row  3E+H+3
    ], axis=0)                   # (3E + H + 4, 3E)
    return packed


def reference_forward(x, raw, n_heads):
    """Pure-JAX reference mirroring the PyTorch module (eval mode)."""
    B, E, T = x.shape
    hd = E // n_heads
    xt = jnp.transpose(x, (0, 2, 1))                      # (B, T, E)
    q = xt @ raw["wq"].T + raw["bq"][0]
    k = xt @ raw["wk"].T + raw["bk"][0]
    v = xt @ raw["wv"].T + raw["bv"][0]

    def split(a):  # (B, T, E) -> (B, H, T, hd)
        return jnp.transpose(a.reshape(B, T, n_heads, hd), (0, 2, 1, 3))

    qh, kh, vh = split(q), split(k), split(v)
    s = jnp.einsum("bhtd,bhsd->bhts", qh, kh) / np.sqrt(hd)
    p = jax.nn.softmax(s, axis=-1)
    o = jnp.einsum("bhts,bhsd->bhtd", p, vh)
    o = jnp.transpose(o, (0, 2, 1, 3)).reshape(B, T, E)
    attn = o @ raw["wo"].T + raw["bo"][0]
    y = xt + attn
    mu = jnp.mean(y, axis=-1, keepdims=True)
    var = jnp.mean((y - mu) ** 2, axis=-1, keepdims=True)
    yn = (y - mu) / jnp.sqrt(var + 1e-5)
    out = yn * raw["ln_g"][0] + raw["ln_b"][0]
    return jnp.transpose(out, (0, 2, 1))


if __name__ == "__main__":
    B, n_sources, T = 2, 16, 8
    n_heads = 8

    key = jax.random.PRNGKey(0)
    kx, kp = jax.random.split(key)
    x = jax.random.normal(kx, (B, n_sources, T), jnp.float32)
    raw = init_params(kp, n_sources)
    packed = pack_params(raw, n_heads)

    out = spatial_attention(x, packed, n_heads=n_heads)
    out = jax.block_until_ready(out)

    ref = reference_forward(x, raw, n_heads)
    assert out.shape == (B, n_sources, T)
    # Tolerance covers pl.reciprocal(approx=True) in the softmax normalization (~2^-12 relative)
    # and MXU f32 matmul rounding on both sides.
    np.testing.assert_allclose(np.asarray(out), np.asarray(ref), atol=2e-3, rtol=2e-3)

    print("KERNEL_OK")
</pallas_src>

<mosaic_0001>
module attributes {stable_mosaic.version = 11 : i64} {
  func.func @spatial_attention_kernel(%arg0: memref<2x16x8xf32, #tpu.memory_space<vmem>>, %arg1: memref<60x48xf32, #tpu.memory_space<vmem>>, %arg2: memref<2x16x8xf32, #tpu.memory_space<vmem>>) attributes {dimension_semantics = [], scalar_prefetch = 0 : i64, scratch_operands = 0 : i64, tpu.core_type = #tpu.core_type<tc>} {
    %c0 = arith.constant 0 : index
    %c0_0 = arith.constant 0 : index
    %0 = vector.load %arg1[%c0, %c0_0] : memref<60x48xf32, #tpu.memory_space<vmem>>, vector<60x48xf32>
    %1 = vector.extract_strided_slice %0 {offsets = [0, 0], sizes = [16, 48], strides = [1, 1]} : vector<60x48xf32> to vector<16x48xf32>
    %2 = vector.extract_strided_slice %0 {offsets = [16, 0], sizes = [16, 16], strides = [1, 1]} : vector<60x48xf32> to vector<16x16xf32>
    %3 = vector.extract_strided_slice %0 {offsets = [32, 0], sizes = [16, 8], strides = [1, 1]} : vector<60x48xf32> to vector<16x8xf32>
    %4 = vector.extract_strided_slice %0 {offsets = [48, 0], sizes = [8, 16], strides = [1, 1]} : vector<60x48xf32> to vector<8x16xf32>
    %5 = vector.extract_strided_slice %0 {offsets = [56, 0], sizes = [1, 48], strides = [1, 1]} : vector<60x48xf32> to vector<1x48xf32>
    %6 = vector.extract_strided_slice %0 {offsets = [57, 0], sizes = [1, 16], strides = [1, 1]} : vector<60x48xf32> to vector<1x16xf32>
    %7 = vector.extract_strided_slice %0 {offsets = [58, 0], sizes = [1, 16], strides = [1, 1]} : vector<60x48xf32> to vector<1x16xf32>
    %8 = vector.extract_strided_slice %0 {offsets = [59, 0], sizes = [1, 16], strides = [1, 1]} : vector<60x48xf32> to vector<1x16xf32>
    %c0_1 = arith.constant 0 : index
    %c0_2 = arith.constant 0 : index
    %c0_3 = arith.constant 0 : index
    %9 = vector.load %arg0[%c0_1, %c0_2, %c0_3] : memref<2x16x8xf32, #tpu.memory_space<vmem>>, vector<2x16x8xf32>
    %10 = vector.extract_strided_slice %9 {offsets = [0, 0, 0], sizes = [1, 16, 8], strides = [1, 1, 1]} : vector<2x16x8xf32> to vector<1x16x8xf32>
    %11 = vector.shape_cast %10 : vector<1x16x8xf32> to vector<16x8xf32>
    %12 = tpu.transpose %11, [1, 0] : vector<16x8xf32> -> vector<8x16xf32>
    %13 = vector.extract_strided_slice %9 {offsets = [1, 0, 0], sizes = [1, 16, 8], strides = [1, 1, 1]} : vector<2x16x8xf32> to vector<1x16x8xf32>
    %14 = vector.shape_cast %13 : vector<1x16x8xf32> to vector<16x8xf32>
    %15 = tpu.transpose %14, [1, 0] : vector<16x8xf32> -> vector<8x16xf32>
    %16 = tpu.concatenate %12, %15 in 0 : vector<8x16xf32>, vector<8x16xf32> -> vector<16x16xf32>
    %cst = arith.constant dense<0.000000e+00> : vector<16x48xf32>
    %17 = tpu.matmul %16, %1, %cst {dimension_numbers = #tpu.dot_dimension_numbers<[1], [0], [0], [1], [0, 0, 1, 1], [], []>} : vector<16x16xf32>, vector<16x48xf32>, vector<16x48xf32> -> vector<16x48xf32>
    %18 = vector.broadcast %5 : vector<1x48xf32> to vector<16x48xf32>
    %19 = arith.addf %17, %18 : vector<16x48xf32>
    %20 = vector.extract_strided_slice %19 {offsets = [0, 0], sizes = [16, 16], strides = [1, 1]} : vector<16x48xf32> to vector<16x16xf32>
    %21 = vector.extract_strided_slice %19 {offsets = [0, 16], sizes = [16, 16], strides = [1, 1]} : vector<16x48xf32> to vector<16x16xf32>
    %22 = vector.extract_strided_slice %19 {offsets = [0, 32], sizes = [16, 16], strides = [1, 1]} : vector<16x48xf32> to vector<16x16xf32>
    %23 = vector.extract_strided_slice %21 {offsets = [0, 0], sizes = [8, 16], strides = [1, 1]} : vector<16x16xf32> to vector<8x16xf32>
    %24 = vector.extract_strided_slice %20 {offsets = [0, 0], sizes = [1, 16], strides = [1, 1]} : vector<16x16xf32> to vector<1x16xf32>
    %25 = vector.broadcast %24 : vector<1x16xf32> to vector<8x16xf32>
    %26 = arith.mulf %25, %23 : vector<8x16xf32>
    %27 = vector.extract_strided_slice %20 {offsets = [1, 0], sizes = [1, 16], strides = [1, 1]} : vector<16x16xf32> to vector<1x16xf32>
    %28 = vector.broadcast %27 : vector<1x16xf32> to vector<8x16xf32>
    %29 = arith.mulf %28, %23 : vector<8x16xf32>
    %30 = vector.extract_strided_slice %20 {offsets = [2, 0], sizes = [1, 16], strides = [1, 1]} : vector<16x16xf32> to vector<1x16xf32>
    %31 = vector.broadcast %30 : vector<1x16xf32> to vector<8x16xf32>
    %32 = arith.mulf %31, %23 : vector<8x16xf32>
    %33 = vector.extract_strided_slice %20 {offsets = [3, 0], sizes = [1, 16], strides = [1, 1]} : vector<16x16xf32> to vector<1x16xf32>
    %34 = vector.broadcast %33 : vector<1x16xf32> to vector<8x16xf32>
    %35 = arith.mulf %34, %23 : vector<8x16xf32>
    %36 = vector.extract_strided_slice %20 {offsets = [4, 0], sizes = [1, 16], strides = [1, 1]} : vector<16x16xf32> to vector<1x16xf32>
    %37 = vector.broadcast %36 : vector<1x16xf32> to vector<8x16xf32>
    %38 = arith.mulf %37, %23 : vector<8x16xf32>
    %39 = vector.extract_strided_slice %20 {offsets = [5, 0], sizes = [1, 16], strides = [1, 1]} : vector<16x16xf32> to vector<1x16xf32>
    %40 = vector.broadcast %39 : vector<1x16xf32> to vector<8x16xf32>
    %41 = arith.mulf %40, %23 : vector<8x16xf32>
    %42 = vector.extract_strided_slice %20 {offsets = [6, 0], sizes = [1, 16], strides = [1, 1]} : vector<16x16xf32> to vector<1x16xf32>
    %43 = vector.broadcast %42 : vector<1x16xf32> to vector<8x16xf32>
    %44 = arith.mulf %43, %23 : vector<8x16xf32>
    %45 = vector.extract_strided_slice %20 {offsets = [7, 0], sizes = [1, 16], strides = [1, 1]} : vector<16x16xf32> to vector<1x16xf32>
    %46 = vector.broadcast %45 : vector<1x16xf32> to vector<8x16xf32>
    %47 = arith.mulf %46, %23 : vector<8x16xf32>
    %48 = vector.extract_strided_slice %21 {offsets = [8, 0], sizes = [8, 16], strides = [1, 1]} : vector<16x16xf32> to vector<8x16xf32>
    %49 = vector.extract_strided_slice %20 {offsets = [8, 0], sizes = [1, 16], strides = [1, 1]} : vector<16x16xf32> to vector<1x16xf32>
    %50 = vector.broadcast %49 : vector<1x16xf32> to vector<8x16xf32>
    %51 = arith.mulf %50, %48 : vector<8x16xf32>
    %52 = vector.extract_strided_slice %20 {offsets = [9, 0], sizes = [1, 16], strides = [1, 1]} : vector<16x16xf32> to vector<1x16xf32>
    %53 = vector.broadcast %52 : vector<1x16xf32> to vector<8x16xf32>
    %54 = arith.mulf %53, %48 : vector<8x16xf32>
    %55 = vector.extract_strided_slice %20 {offsets = [10, 0], sizes = [1, 16], strides = [1, 1]} : vector<16x16xf32> to vector<1x16xf32>
    %56 = vector.broadcast %55 : vector<1x16xf32> to vector<8x16xf32>
    %57 = arith.mulf %56, %48 : vector<8x16xf32>
    %58 = vector.extract_strided_slice %20 {offsets = [11, 0], sizes = [1, 16], strides = [1, 1]} : vector<16x16xf32> to vector<1x16xf32>
    %59 = vector.broadcast %58 : vector<1x16xf32> to vector<8x16xf32>
    %60 = arith.mulf %59, %48 : vector<8x16xf32>
    %61 = vector.extract_strided_slice %20 {offsets = [12, 0], sizes = [1, 16], strides = [1, 1]} : vector<16x16xf32> to vector<1x16xf32>
    %62 = vector.broadcast %61 : vector<1x16xf32> to vector<8x16xf32>
    %63 = arith.mulf %62, %48 : vector<8x16xf32>
    %64 = vector.extract_strided_slice %20 {offsets = [13, 0], sizes = [1, 16], strides = [1, 1]} : vector<16x16xf32> to vector<1x16xf32>
    %65 = vector.broadcast %64 : vector<1x16xf32> to vector<8x16xf32>
    %66 = arith.mulf %65, %48 : vector<8x16xf32>
    %67 = vector.extract_strided_slice %20 {offsets = [14, 0], sizes = [1, 16], strides = [1, 1]} : vector<16x16xf32> to vector<1x16xf32>
    %68 = vector.broadcast %67 : vector<1x16xf32> to vector<8x16xf32>
    %69 = arith.mulf %68, %48 : vector<8x16xf32>
    %70 = vector.extract_strided_slice %20 {offsets = [15, 0], sizes = [1, 16], strides = [1, 1]} : vector<16x16xf32> to vector<1x16xf32>
    %71 = vector.broadcast %70 : vector<1x16xf32> to vector<8x16xf32>
    %72 = arith.mulf %71, %48 : vector<8x16xf32>
    %73 = vector.shape_cast %26 : vector<8x16xf32> to vector<1x8x16xf32>
    %74 = vector.shape_cast %29 : vector<8x16xf32> to vector<1x8x16xf32>
    %75 = vector.shape_cast %32 : vector<8x16xf32> to vector<1x8x16xf32>
    %76 = vector.shape_cast %35 : vector<8x16xf32> to vector<1x8x16xf32>
    %77 = vector.shape_cast %38 : vector<8x16xf32> to vector<1x8x16xf32>
    %78 = vector.shape_cast %41 : vector<8x16xf32> to vector<1x8x16xf32>
    %79 = vector.shape_cast %44 : vector<8x16xf32> to vector<1x8x16xf32>
    %80 = vector.shape_cast %47 : vector<8x16xf32> to vector<1x8x16xf32>
    %81 = vector.shape_cast %51 : vector<8x16xf32> to vector<1x8x16xf32>
    %82 = vector.shape_cast %54 : vector<8x16xf32> to vector<1x8x16xf32>
    %83 = vector.shape_cast %57 : vector<8x16xf32> to vector<1x8x16xf32>
    %84 = vector.shape_cast %60 : vector<8x16xf32> to vector<1x8x16xf32>
    %85 = vector.shape_cast %63 : vector<8x16xf32> to vector<1x8x16xf32>
    %86 = vector.shape_cast %66 : vector<8x16xf32> to vector<1x8x16xf32>
    %87 = vector.shape_cast %69 : vector<8x16xf32> to vector<1x8x16xf32>
    %88 = vector.shape_cast %72 : vector<8x16xf32> to vector<1x8x16xf32>
    %89 = tpu.concatenate %73, %74, %75, %76, %77, %78, %79, %80, %81, %82, %83, %84, %85, %86, %87, %88 in 0 : vector<1x8x16xf32>, vector<1x8x16xf32>, vector<1x8x16xf32>, vector<1x8x16xf32>, vector<1x8x16xf32>, vector<1x8x16xf32>, vector<1x8x16xf32>, vector<1x8x16xf32>, vector<1x8x16xf32>, vector<1x8x16xf32>, vector<1x8x16xf32>, vector<1x8x16xf32>, vector<1x8x16xf32>, vector<1x8x16xf32>, vector<1x8x16xf32>, vector<1x8x16xf32> -> vector<16x8x16xf32>
    %90 = vector.shape_cast %89 : vector<16x8x16xf32> to vector<128x16xf32>
    %cst_4 = arith.constant dense<0.000000e+00> : vector<128x8xf32>
    %91 = tpu.matmul %90, %3, %cst_4 {dimension_numbers = #tpu.dot_dimension_numbers<[1], [0], [0], [1], [0, 0, 1, 1], [], []>} : vector<128x16xf32>, vector<16x8xf32>, vector<128x8xf32> -> vector<128x8xf32>
    %92 = vector.shape_cast %91 : vector<128x8xf32> to vector<16x8x8xf32>
    %cst_5 = arith.constant dense<0xFF800000> : vector<16x8xf32>
    %93 = vector.multi_reduction <maximumf>, %92, %cst_5 [1] : vector<16x8x8xf32> to vector<16x8xf32>
    %94 = vector.shape_cast %93 : vector<16x8xf32> to vector<16x1x8xf32>
    %95 = vector.broadcast %94 : vector<16x1x8xf32> to vector<16x8x8xf32>
    %96 = arith.subf %92, %95 : vector<16x8x8xf32>
    %97 = math.exp %96 : vector<16x8x8xf32>
    %cst_6 = arith.constant dense<0.000000e+00> : vector<16x8xf32>
    %98 = vector.multi_reduction <add>, %97, %cst_6 [1] : vector<16x8x8xf32> to vector<16x8xf32>
    %99 = vector.shape_cast %98 : vector<16x8xf32> to vector<16x1x8xf32>
    %100 = tpu.reciprocal %99 {approx = true} : vector<16x1x8xf32> -> vector<16x1x8xf32>
    %101 = vector.broadcast %100 : vector<16x1x8xf32> to vector<16x8x8xf32>
    %102 = arith.mulf %97, %101 : vector<16x8x8xf32>
    %103 = vector.shape_cast %102 : vector<16x8x8xf32> to vector<128x8xf32>
    %cst_7 = arith.constant dense<0.000000e+00> : vector<128x16xf32>
    %104 = tpu.matmul %103, %4, %cst_7 {dimension_numbers = #tpu.dot_dimension_numbers<[1], [0], [0], [1], [0, 0, 1, 1], [], []>} : vector<128x8xf32>, vector<8x16xf32>, vector<128x16xf32> -> vector<128x16xf32>
    %105 = vector.shape_cast %104 : vector<128x16xf32> to vector<16x8x16xf32>
    %106 = vector.extract_strided_slice %22 {offsets = [0, 0], sizes = [8, 16], strides = [1, 1]} : vector<16x16xf32> to vector<8x16xf32>
    %107 = vector.extract_strided_slice %105 {offsets = [0, 0, 0], sizes = [1, 8, 16], strides = [1, 1, 1]} : vector<16x8x16xf32> to vector<1x8x16xf32>
    %108 = vector.shape_cast %107 : vector<1x8x16xf32> to vector<8x16xf32>
    %109 = arith.mulf %108, %106 : vector<8x16xf32>
    %cst_8 = arith.constant dense<0.000000e+00> : vector<16xf32>
    %110 = vector.multi_reduction <add>, %109, %cst_8 [0] : vector<8x16xf32> to vector<16xf32>
    %111 = vector.shape_cast %110 : vector<16xf32> to vector<1x16xf32>
    %112 = vector.extract_strided_slice %105 {offsets = [1, 0, 0], sizes = [1, 8, 16], strides = [1, 1, 1]} : vector<16x8x16xf32> to vector<1x8x16xf32>
    %113 = vector.shape_cast %112 : vector<1x8x16xf32> to vector<8x16xf32>
    %114 = arith.mulf %113, %106 : vector<8x16xf32>
    %cst_9 = arith.constant dense<0.000000e+00> : vector<16xf32>
    %115 = vector.multi_reduction <add>, %114, %cst_9 [0] : vector<8x16xf32> to vector<16xf32>
    %116 = vector.shape_cast %115 : vector<16xf32> to vector<1x16xf32>
    %117 = vector.extract_strided_slice %105 {offsets = [2, 0, 0], sizes = [1, 8, 16], strides = [1, 1, 1]} : vector<16x8x16xf32> to vector<1x8x16xf32>
    %118 = vector.shape_cast %117 : vector<1x8x16xf32> to vector<8x16xf32>
    %119 = arith.mulf %118, %106 : vector<8x16xf32>
    %cst_10 = arith.constant dense<0.000000e+00> : vector<16xf32>
    %120 = vector.multi_reduction <add>, %119, %cst_10 [0] : vector<8x16xf32> to vector<16xf32>
    %121 = vector.shape_cast %120 : vector<16xf32> to vector<1x16xf32>
    %122 = vector.extract_strided_slice %105 {offsets = [3, 0, 0], sizes = [1, 8, 16], strides = [1, 1, 1]} : vector<16x8x16xf32> to vector<1x8x16xf32>
    %123 = vector.shape_cast %122 : vector<1x8x16xf32> to vector<8x16xf32>
    %124 = arith.mulf %123, %106 : vector<8x16xf32>
    %cst_11 = arith.constant dense<0.000000e+00> : vector<16xf32>
    %125 = vector.multi_reduction <add>, %124, %cst_11 [0] : vector<8x16xf32> to vector<16xf32>
    %126 = vector.shape_cast %125 : vector<16xf32> to vector<1x16xf32>
    %127 = vector.extract_strided_slice %105 {offsets = [4, 0, 0], sizes = [1, 8, 16], strides = [1, 1, 1]} : vector<16x8x16xf32> to vector<1x8x16xf32>
    %128 = vector.shape_cast %127 : vector<1x8x16xf32> to vector<8x16xf32>
    %129 = arith.mulf %128, %106 : vector<8x16xf32>
    %cst_12 = arith.constant dense<0.000000e+00> : vector<16xf32>
    %130 = vector.multi_reduction <add>, %129, %cst_12 [0] : vector<8x16xf32> to vector<16xf32>
    %131 = vector.shape_cast %130 : vector<16xf32> to vector<1x16xf32>
    %132 = vector.extract_strided_slice %105 {offsets = [5, 0, 0], sizes = [1, 8, 16], strides = [1, 1, 1]} : vector<16x8x16xf32> to vector<1x8x16xf32>
    %133 = vector.shape_cast %132 : vector<1x8x16xf32> to vector<8x16xf32>
    %134 = arith.mulf %133, %106 : vector<8x16xf32>
    %cst_13 = arith.constant dense<0.000000e+00> : vector<16xf32>
    %135 = vector.multi_reduction <add>, %134, %cst_13 [0] : vector<8x16xf32> to vector<16xf32>
    %136 = vector.shape_cast %135 : vector<16xf32> to vector<1x16xf32>
    %137 = vector.extract_strided_slice %105 {offsets = [6, 0, 0], sizes = [1, 8, 16], strides = [1, 1, 1]} : vector<16x8x16xf32> to vector<1x8x16xf32>
    %138 = vector.shape_cast %137 : vector<1x8x16xf32> to vector<8x16xf32>
    %139 = arith.mulf %138, %106 : vector<8x16xf32>
    %cst_14 = arith.constant dense<0.000000e+00> : vector<16xf32>
    %140 = vector.multi_reduction <add>, %139, %cst_14 [0] : vector<8x16xf32> to vector<16xf32>
    %141 = vector.shape_cast %140 : vector<16xf32> to vector<1x16xf32>
    %142 = vector.extract_strided_slice %105 {offsets = [7, 0, 0], sizes = [1, 8, 16], strides = [1, 1, 1]} : vector<16x8x16xf32> to vector<1x8x16xf32>
    %143 = vector.shape_cast %142 : vector<1x8x16xf32> to vector<8x16xf32>
    %144 = arith.mulf %143, %106 : vector<8x16xf32>
    %cst_15 = arith.constant dense<0.000000e+00> : vector<16xf32>
    %145 = vector.multi_reduction <add>, %144, %cst_15 [0] : vector<8x16xf32> to vector<16xf32>
    %146 = vector.shape_cast %145 : vector<16xf32> to vector<1x16xf32>
    %147 = vector.extract_strided_slice %22 {offsets = [8, 0], sizes = [8, 16], strides = [1, 1]} : vector<16x16xf32> to vector<8x16xf32>
    %148 = vector.extract_strided_slice %105 {offsets = [8, 0, 0], sizes = [1, 8, 16], strides = [1, 1, 1]} : vector<16x8x16xf32> to vector<1x8x16xf32>
    %149 = vector.shape_cast %148 : vector<1x8x16xf32> to vector<8x16xf32>
    %150 = arith.mulf %149, %147 : vector<8x16xf32>
    %cst_16 = arith.constant dense<0.000000e+00> : vector<16xf32>
    %151 = vector.multi_reduction <add>, %150, %cst_16 [0] : vector<8x16xf32> to vector<16xf32>
    %152 = vector.shape_cast %151 : vector<16xf32> to vector<1x16xf32>
    %153 = vector.extract_strided_slice %105 {offsets = [9, 0, 0], sizes = [1, 8, 16], strides = [1, 1, 1]} : vector<16x8x16xf32> to vector<1x8x16xf32>
    %154 = vector.shape_cast %153 : vector<1x8x16xf32> to vector<8x16xf32>
    %155 = arith.mulf %154, %147 : vector<8x16xf32>
    %cst_17 = arith.constant dense<0.000000e+00> : vector<16xf32>
    %156 = vector.multi_reduction <add>, %155, %cst_17 [0] : vector<8x16xf32> to vector<16xf32>
    %157 = vector.shape_cast %156 : vector<16xf32> to vector<1x16xf32>
    %158 = vector.extract_strided_slice %105 {offsets = [10, 0, 0], sizes = [1, 8, 16], strides = [1, 1, 1]} : vector<16x8x16xf32> to vector<1x8x16xf32>
    %159 = vector.shape_cast %158 : vector<1x8x16xf32> to vector<8x16xf32>
    %160 = arith.mulf %159, %147 : vector<8x16xf32>
    %cst_18 = arith.constant dense<0.000000e+00> : vector<16xf32>
    %161 = vector.multi_reduction <add>, %160, %cst_18 [0] : vector<8x16xf32> to vector<16xf32>
    %162 = vector.shape_cast %161 : vector<16xf32> to vector<1x16xf32>
    %163 = vector.extract_strided_slice %105 {offsets = [11, 0, 0], sizes = [1, 8, 16], strides = [1, 1, 1]} : vector<16x8x16xf32> to vector<1x8x16xf32>
    %164 = vector.shape_cast %163 : vector<1x8x16xf32> to vector<8x16xf32>
    %165 = arith.mulf %164, %147 : vector<8x16xf32>
    %cst_19 = arith.constant dense<0.000000e+00> : vector<16xf32>
    %166 = vector.multi_reduction <add>, %165, %cst_19 [0] : vector<8x16xf32> to vector<16xf32>
    %167 = vector.shape_cast %166 : vector<16xf32> to vector<1x16xf32>
    %168 = vector.extract_strided_slice %105 {offsets = [12, 0, 0], sizes = [1, 8, 16], strides = [1, 1, 1]} : vector<16x8x16xf32> to vector<1x8x16xf32>
    %169 = vector.shape_cast %168 : vector<1x8x16xf32> to vector<8x16xf32>
    %170 = arith.mulf %169, %147 : vector<8x16xf32>
    %cst_20 = arith.constant dense<0.000000e+00> : vector<16xf32>
    %171 = vector.multi_reduction <add>, %170, %cst_20 [0] : vector<8x16xf32> to vector<16xf32>
    %172 = vector.shape_cast %171 : vector<16xf32> to vector<1x16xf32>
    %173 = vector.extract_strided_slice %105 {offsets = [13, 0, 0], sizes = [1, 8, 16], strides = [1, 1, 1]} : vector<16x8x16xf32> to vector<1x8x16xf32>
    %174 = vector.shape_cast %173 : vector<1x8x16xf32> to vector<8x16xf32>
    %175 = arith.mulf %174, %147 : vector<8x16xf32>
    %cst_21 = arith.constant dense<0.000000e+00> : vector<16xf32>
    %176 = vector.multi_reduction <add>, %175, %cst_21 [0] : vector<8x16xf32> to vector<16xf32>
    %177 = vector.shape_cast %176 : vector<16xf32> to vector<1x16xf32>
    %178 = vector.extract_strided_slice %105 {offsets = [14, 0, 0], sizes = [1, 8, 16], strides = [1, 1, 1]} : vector<16x8x16xf32> to vector<1x8x16xf32>
    %179 = vector.shape_cast %178 : vector<1x8x16xf32> to vector<8x16xf32>
    %180 = arith.mulf %179, %147 : vector<8x16xf32>
    %cst_22 = arith.constant dense<0.000000e+00> : vector<16xf32>
    %181 = vector.multi_reduction <add>, %180, %cst_22 [0] : vector<8x16xf32> to vector<16xf32>
    %182 = vector.shape_cast %181 : vector<16xf32> to vector<1x16xf32>
    %183 = vector.extract_strided_slice %105 {offsets = [15, 0, 0], sizes = [1, 8, 16], strides = [1, 1, 1]} : vector<16x8x16xf32> to vector<1x8x16xf32>
    %184 = vector.shape_cast %183 : vector<1x8x16xf32> to vector<8x16xf32>
    %185 = arith.mulf %184, %147 : vector<8x16xf32>
    %cst_23 = arith.constant dense<0.000000e+00> : vector<16xf32>
    %186 = vector.multi_reduction <add>, %185, %cst_23 [0] : vector<8x16xf32> to vector<16xf32>
    %187 = vector.shape_cast %186 : vector<16xf32> to vector<1x16xf32>
    %188 = tpu.concatenate %111, %116, %121, %126, %131, %136, %141, %146, %152, %157, %162, %167, %172, %177, %182, %187 in 0 : vector<1x16xf32>, vector<1x16xf32>, vector<1x16xf32>, vector<1x16xf32>, vector<1x16xf32>, vector<1x16xf32>, vector<1x16xf32>, vector<1x16xf32>, vector<1x16xf32>, vector<1x16xf32>, vector<1x16xf32>, vector<1x16xf32>, vector<1x16xf32>, vector<1x16xf32>, vector<1x16xf32>, vector<1x16xf32> -> vector<16x16xf32>
    %cst_24 = arith.constant dense<0.000000e+00> : vector<16x16xf32>
    %189 = tpu.matmul %188, %2, %cst_24 {dimension_numbers = #tpu.dot_dimension_numbers<[1], [0], [0], [1], [0, 0, 1, 1], [], []>} : vector<16x16xf32>, vector<16x16xf32>, vector<16x16xf32> -> vector<16x16xf32>
    %190 = vector.broadcast %6 : vector<1x16xf32> to vector<16x16xf32>
    %191 = arith.addf %189, %190 : vector<16x16xf32>
    %192 = arith.addf %16, %191 : vector<16x16xf32>
    %cst_25 = arith.constant dense<0.000000e+00> : vector<16xf32>
    %193 = vector.multi_reduction <add>, %192, %cst_25 [1] : vector<16x16xf32> to vector<16xf32>
    %194 = vector.shape_cast %193 : vector<16xf32> to vector<16x1xf32>
    %cst_26 = arith.constant 1.600000e+01 : f32
    %195 = vector.broadcast %cst_26 : f32 to vector<16x1xf32>
    %196 = arith.divf %194, %195 : vector<16x1xf32>
    %197 = vector.broadcast %196 : vector<16x1xf32> to vector<16x16xf32>
    %198 = arith.subf %192, %197 : vector<16x16xf32>
    %199 = arith.mulf %198, %198 : vector<16x16xf32>
    %cst_27 = arith.constant dense<0.000000e+00> : vector<16xf32>
    %200 = vector.multi_reduction <add>, %199, %cst_27 [1] : vector<16x16xf32> to vector<16xf32>
    %201 = vector.shape_cast %200 : vector<16xf32> to vector<16x1xf32>
    %cst_28 = arith.constant 1.600000e+01 : f32
    %202 = vector.broadcast %cst_28 : f32 to vector<16x1xf32>
    %203 = arith.divf %201, %202 : vector<16x1xf32>
    %cst_29 = arith.constant 9.99999974E-6 : f32
    %204 = vector.broadcast %cst_29 : f32 to vector<16x1xf32>
    %205 = arith.addf %203, %204 : vector<16x1xf32>
    %206 = math.rsqrt %205 : vector<16x1xf32>
    %207 = vector.broadcast %206 : vector<16x1xf32> to vector<16x16xf32>
    %208 = arith.mulf %198, %207 : vector<16x16xf32>
    %209 = vector.broadcast %7 : vector<1x16xf32> to vector<16x16xf32>
    %210 = arith.mulf %208, %209 : vector<16x16xf32>
    %211 = vector.broadcast %8 : vector<1x16xf32> to vector<16x16xf32>
    %212 = arith.addf %210, %211 : vector<16x16xf32>
    %213 = vector.extract_strided_slice %212 {offsets = [0, 0], sizes = [8, 16], strides = [1, 1]} : vector<16x16xf32> to vector<8x16xf32>
    %214 = tpu.transpose %213, [1, 0] : vector<8x16xf32> -> vector<16x8xf32>
    %215 = vector.extract_strided_slice %212 {offsets = [8, 0], sizes = [8, 16], strides = [1, 1]} : vector<16x16xf32> to vector<8x16xf32>
    %216 = tpu.transpose %215, [1, 0] : vector<8x16xf32> -> vector<16x8xf32>
    %217 = vector.shape_cast %214 : vector<16x8xf32> to vector<1x16x8xf32>
    %218 = vector.shape_cast %216 : vector<16x8xf32> to vector<1x16x8xf32>
    %219 = tpu.concatenate %217, %218 in 0 : vector<1x16x8xf32>, vector<1x16x8xf32> -> vector<2x16x8xf32>
    %c0_30 = arith.constant 0 : index
    %c0_31 = arith.constant 0 : index
    %c0_32 = arith.constant 0 : index
    %220 = vector.load %arg2[%c0_30, %c0_31, %c0_32] : memref<2x16x8xf32, #tpu.memory_space<vmem>>, vector<2x16x8xf32>
    tpu.vector_store %arg2[%c0_30, %c0_31, %c0_32], %219 {strides = array<i32>} : memref<2x16x8xf32, #tpu.memory_space<vmem>>, vector<2x16x8xf32>,
    return
  }
}

</mosaic_0001>

<llo_original>
// kernel: tpu_custom_call.1
$region0: #{tpu_custom_call.1}
  #allocation0 [shape = 'u32[]', space=smem, size = 0x4, offset = 0x4, fixed_abs, tag = 'smem constant byte address 0x4 - core index']
  #allocation1 [shape = 'u32[144,128]{1,0:T(1,128)}', space=vmem, size = 0x12000, scoped, tag = 'internal scratch']
  %s0 = inlined_call_operand.vmem [shape: f32[2,16,8], index: 0, kind: input, shape index: {}]
  %s1 = inlined_call_operand.vmem [shape: f32[60,48], index: 1, kind: input, shape index: {}]
  %s2 = inlined_call_operand.vmem [shape: f32[2,16,8], index: 2, kind: output, shape index: {}]
  %s3 = sld [smem:[#allocation0]]
  $region18: #{tpu_custom_call.1} parent=0
    _
  %s5 = ssub.s32 1, %s3
  %s6 = scalar_select 0, %s5, %s3
  // Predicated region
  $region2: #{tpu_custom_call.1} parent=0 // pred_check
    _
  $region3: #{tpu_custom_call.1} parent=0 // pred_check_branch
    %8 = sbr.rel (0) target = $region5
  $region4: #{tpu_custom_call.1} parent=0 // pred_region
    _
  $region5: #{tpu_custom_call.1} parent=0 // pred_fallthru
    _
  // Predicated region
  $region6: #{tpu_custom_call.1} parent=0 // pred_check
    _
  $region7: #{tpu_custom_call.1} parent=0 // pred_check_branch
    %10 = sbr.rel (0) target = $region9
  $region8: #{tpu_custom_call.1} parent=0 // pred_region
    _
  $region9: #{tpu_custom_call.1} parent=0 // pred_fallthru
    _
  %v11 = vld [vmem:[%s1] sm:$0xff]
  %v12 = vld [vmem:[%s1 + $0x8] sm:$0xff]
  %v13 = vld [vmem:[%s1 + $0x10] sm:$0xff]
  %v14 = vld [vmem:[%s1 + $0x18] sm:$0xff]
  %v15 = vld [vmem:[%s1 + $0x20] sm:$0xff]
  %v16 = vld [vmem:[%s1 + $0x28] sm:$0xff]
  %v17 = vld [vmem:[%s1 + $0x30] sm:$0xff]
  %v18 = vld [vmem:[%s1 + $0x38] sm:$0xf]
  %v19 = vld [vmem:[%s0] sm:$0xff]
  %v20 = vld [vmem:[%s0 + $0x8] sm:$0xff]
  %v21 = vld [vmem:[%s0 + $0x10] sm:$0xff]
  %v22 = vld [vmem:[%s0 + $0x18] sm:$0xff]
  %23 = vxpose.xlu0.b32.start [1/16] %v19, 128
  %24 = vxpose.xlu0.b32.cont [2/16] %v20, 128
  %25 = vxpose.xlu0.b32.cont [3/16] 0.0, 128
  %26 = vxpose.xlu0.b32.cont [4/16] 0.0, 128
  %27 = vxpose.xlu0.b32.cont [5/16] 0.0, 128
  %28 = vxpose.xlu0.b32.cont [6/16] 0.0, 128
  %29 = vxpose.xlu0.b32.cont [7/16] 0.0, 128
  %30 = vxpose.xlu0.b32.cont [8/16] 0.0, 128
  %31 = vxpose.xlu0.b32.cont [9/16] 0.0, 128
  %32 = vxpose.xlu0.b32.cont [10/16] 0.0, 128
  %33 = vxpose.xlu0.b32.cont [11/16] 0.0, 128
  %34 = vxpose.xlu0.b32.cont [12/16] 0.0, 128
  %35 = vxpose.xlu0.b32.cont [13/16] 0.0, 128
  %36 = vxpose.xlu0.b32.cont [14/16] 0.0, 128
  %37 = vxpose.xlu0.b32.cont [15/16] 0.0, 128
  %38 = vxpose.xlu0.b32.end [16/16] 0.0, 128
  %v39 = vpop.trf.xlu0
  %v40 = vpop.trf.xlu0
  %v41 = vpop.trf.xlu0
  %v42 = vpop.trf.xlu0
  %v43 = vpop.trf.xlu0
  %v44 = vpop.trf.xlu0
  %v45 = vpop.trf.xlu0
  %v46 = vpop.trf.xlu0
  %v47 = vpop.trf.xlu0
  %v48 = vpop.trf.xlu0
  %v49 = vpop.trf.xlu0
  %v50 = vpop.trf.xlu0
  %v51 = vpop.trf.xlu0
  %v52 = vpop.trf.xlu0
  %v53 = vpop.trf.xlu0
  %v54 = vpop.trf.xlu0
  %55 = vxpose.xlu0.b32.start [1/16] %v21, 128
  %56 = vxpose.xlu0.b32.cont [2/16] %v22, 128
  %57 = vxpose.xlu0.b32.cont [3/16] 0.0, 128
  %58 = vxpose.xlu0.b32.cont [4/16] 0.0, 128
  %59 = vxpose.xlu0.b32.cont [5/16] 0.0, 128
  %60 = vxpose.xlu0.b32.cont [6/16] 0.0, 128
  %61 = vxpose.xlu0.b32.cont [7/16] 0.0, 128
  %62 = vxpose.xlu0.b32.cont [8/16] 0.0, 128
  %63 = vxpose.xlu0.b32.cont [9/16] 0.0, 128
  %64 = vxpose.xlu0.b32.cont [10/16] 0.0, 128
  %65 = vxpose.xlu0.b32.cont [11/16] 0.0, 128
  %66 = vxpose.xlu0.b32.cont [12/16] 0.0, 128
  %67 = vxpose.xlu0.b32.cont [13/16] 0.0, 128
  %68 = vxpose.xlu0.b32.cont [14/16] 0.0, 128
  %69 = vxpose.xlu0.b32.cont [15/16] 0.0, 128
  %70 = vxpose.xlu0.b32.end [16/16] 0.0, 128
  %v71 = vpop.trf.xlu0
  %v72 = vpop.trf.xlu0
  %v73 = vpop.trf.xlu0
  %v74 = vpop.trf.xlu0
  %v75 = vpop.trf.xlu0
  %v76 = vpop.trf.xlu0
  %v77 = vpop.trf.xlu0
  %v78 = vpop.trf.xlu0
  %v79 = vpop.trf.xlu0
  %v80 = vpop.trf.xlu0
  %v81 = vpop.trf.xlu0
  %v82 = vpop.trf.xlu0
  %v83 = vpop.trf.xlu0
  %v84 = vpop.trf.xlu0
  %v85 = vpop.trf.xlu0
  %v86 = vpop.trf.xlu0
  %v87 = vlaneseq
  %v88 = vshrl.u32 %v87, 7
  %v89 = vsub.s32 0, %v88
  %v90 = vrot.slane %v18, %v89
  %vm91 = vcmask 130048
  %v93 = vsel %vm91, %v39, 0
  %v96 = vsel %vm91, %v71, 0
  %98 = vmatprep.subr.mxu0 0.0
  %99 = vmatpush1.msra.mxu0 0.0
  %100 = vmatprep.subr.mxu0 0.0
  %101 = vmatpush1.msra.mxu0 0.0
  %102 = vmatprep.subr.mxu0 0.0
  %103 = vmatpush1.msra.mxu0 0.0
  %104 = vmatprep.subr.mxu0 0.0
  %105 = vmatpush1.msra.mxu0 0.0
  %106 = vmatprep.subr.mxu0 0.0
  %107 = vmatpush1.msra.mxu0 0.0
  %108 = vmatprep.subr.mxu0 0.0
  %109 = vmatpush1.msra.mxu0 0.0
  %110 = vmatprep.subr.mxu0 0.0
  %111 = vmatpush1.msra.mxu0 0.0
  %112 = vmatprep.subr.mxu0 0.0
  %113 = vmatpush1.msra.mxu0 0.0
  %114 = vmatprep.subr.mxu0 0.0
  %115 = vmatpush1.msra.mxu0 0.0
  %116 = vmatprep.subr.mxu0 0.0
  %117 = vmatpush1.msra.mxu0 0.0
  %118 = vmatprep.subr.mxu0 0.0
  %119 = vmatpush1.msra.mxu0 0.0
  %120 = vmatprep.subr.mxu0 0.0
  %121 = vmatpush1.msra.mxu0 0.0
  %122 = vmatprep.subr.mxu0 0.0
  %123 = vmatpush1.msra.mxu0 0.0
  %124 = vmatprep.subr.mxu0 0.0
  %125 = vmatpush1.msra.mxu0 0.0
  %126 = vmatprep.subr.mxu0 0.0
  %127 = vmatpush1.msra.mxu0 %v12
  %128 = vmatprep.subr.mxu0 0.0
  %129 = vmatpush1.msra.mxu0 %v11
  %130 = vmatprep.subr.mxu0 0.0
  %131 = vmatpush2.msra.mxu0 0.0
  %132 = vmatprep.subr.mxu0 0.0
  %133 = vmatpush2.msra.mxu0 0.0
  %134 = vmatprep.subr.mxu0 0.0
  %135 = vmatpush2.msra.mxu0 0.0
  %136 = vmatprep.subr.mxu0 0.0
  %137 = vmatpush2.msra.mxu0 0.0
  %138 = vmatprep.subr.mxu0 0.0
  %139 = vmatpush2.msra.mxu0 0.0
  %140 = vmatprep.subr.mxu0 0.0
  %141 = vmatpush2.msra.mxu0 0.0
  %142 = vmatprep.subr.mxu0 0.0
  %143 = vmatpush2.msra.mxu0 0.0
  %144 = vmatprep.subr.mxu0 0.0
  %145 = vmatpush2.msra.mxu0 0.0
  %146 = vmatprep.subr.mxu0 0.0
  %147 = vmatpush2.msra.mxu0 0.0
  %148 = vmatprep.subr.mxu0 0.0
  %149 = vmatpush2.msra.mxu0 0.0
  %150 = vmatprep.subr.mxu0 0.0
  %151 = vmatpush2.msra.mxu0 0.0
  %152 = vmatprep.subr.mxu0 0.0
  %153 = vmatpush2.msra.mxu0 0.0
  %154 = vmatprep.subr.mxu0 0.0
  %155 = vmatpush2.msra.mxu0 0.0
  %156 = vmatprep.subr.mxu0 0.0
  %157 = vmatpush2.msra.mxu0 0.0
  %158 = vmatprep.subr.mxu0 0.0
  %159 = vmatpush2.msra.mxu0 0.0
  %160 = vmatprep.subr.mxu0 0.0
  %161 = vmatpush2.msra.mxu0 0.0
  %162 = vmatprep.mubr.f32.mxu0 0.0
  %163 = vmatmul.mubr.f32.gmra.mxu0 %v93
  %v164 = vpop.f32.mrf.mxu0
  %v165 = vadd.f32 %v90, %v164
  %v166 = vpop.f32.mrf.mxu0
  %167 = vmatprep.mubr.f32.mxu0 0.0
  %168 = vmatmul.mubr.f32.gmra.mxu0 %v96
  %v169 = vpop.f32.mrf.mxu0
  %v170 = vadd.f32 %v90, %v169
  %v171 = vpop.f32.mrf.mxu0
  %172 = vdwg.mxu0
  %v173 = vlaneseq
  %v174 = vshrl.u32 %v173, 7
  %v175 = vsub.s32 0, %v174
  %v176 = vrot.slane %v165, %v175
  %178 = vrot.lane.b32.xlu0 %v165, 112
  %v179 = vpop.permute.xlu0 %178
  %v181 = vmul.f32 %v176, %v179
  %v182 = vlaneseq
  %v183 = vshrl.u32 %v182, 7
  %v184 = vsub.s32 1, %v183
  %v185 = vrot.slane %v165, %v184
  %v186 = vmul.f32 %v185, %v179
  %v187 = vlaneseq
  %v188 = vshrl.u32 %v187, 7
  %v189 = vsub.s32 2, %v188
  %v190 = vrot.slane %v165, %v189
  %v191 = vmul.f32 %v190, %v179
  %v192 = vlaneseq
  %v193 = vshrl.u32 %v192, 7
  %v194 = vsub.s32 3, %v193
  %v195 = vrot.slane %v165, %v194
  %v196 = vmul.f32 %v195, %v179
  %v197 = vlaneseq
  %v198 = vshrl.u32 %v197, 7
  %v199 = vsub.s32 4, %v198
  %v200 = vrot.slane %v165, %v199
  %v201 = vmul.f32 %v200, %v179
  %v202 = vlaneseq
  %v203 = vshrl.u32 %v202, 7
  %v204 = vsub.s32 5, %v203
  %v205 = vrot.slane %v165, %v204
  %v206 = vmul.f32 %v205, %v179
  %v207 = vlaneseq
  %v208 = vshrl.u32 %v207, 7
  %v209 = vsub.s32 6, %v208
  %v210 = vrot.slane %v165, %v209
  %v211 = vmul.f32 %v210, %v179
  %v212 = vlaneseq
  %v213 = vshrl.u32 %v212, 7
  %v214 = vsub.s32 7, %v213
  %v215 = vrot.slane %v165, %v214
  %v216 = vmul.f32 %v215, %v179
  %v217 = vlaneseq
  %v218 = vshrl.u32 %v217, 7
  %v219 = vsub.s32 0, %v218
  %v220 = vrot.slane %v170, %v219
  %222 = vrot.lane.b32.xlu0 %v170, 112
  %v223 = vpop.permute.xlu0 %222
  %v225 = vmul.f32 %v220, %v223
  %v226 = vlaneseq
  %v227 = vshrl.u32 %v226, 7
  %v228 = vsub.s32 1, %v227
  %v229 = vrot.slane %v170, %v228
  %v230 = vmul.f32 %v229, %v223
  %v231 = vlaneseq
  %v232 = vshrl.u32 %v231, 7
  %v233 = vsub.s32 2, %v232
  %v234 = vrot.slane %v170, %v233
  %v235 = vmul.f32 %v234, %v223
  %v236 = vlaneseq
  %v237 = vshrl.u32 %v236, 7
  %v238 = vsub.s32 3, %v237
  %v239 = vrot.slane %v170, %v238
  %v240 = vmul.f32 %v239, %v223
  %v241 = vlaneseq
  %v242 = vshrl.u32 %v241, 7
  %v243 = vsub.s32 4, %v242
  %v244 = vrot.slane %v170, %v243
  %v245 = vmul.f32 %v244, %v223
  %v246 = vlaneseq
  %v247 = vshrl.u32 %v246, 7
  %v248 = vsub.s32 5, %v247
  %v249 = vrot.slane %v170, %v248
  %v250 = vmul.f32 %v249, %v223
  %v251 = vlaneseq
  %v252 = vshrl.u32 %v251, 7
  %v253 = vsub.s32 6, %v252
  %v254 = vrot.slane %v170, %v253
  %v255 = vmul.f32 %v254, %v223
  %v256 = vlaneseq
  %v257 = vshrl.u32 %v256, 7
  %v258 = vsub.s32 7, %v257
  %v259 = vrot.slane %v170, %v258
  %v260 = vmul.f32 %v259, %v223
  %v262 = vsel %vm91, %v181, 0
  %v265 = vsel %vm91, %v186, 0
  %v268 = vsel %vm91, %v191, 0
  %v271 = vsel %vm91, %v196, 0
  %v274 = vsel %vm91, %v201, 0
  %v277 = vsel %vm91, %v206, 0
  %v280 = vsel %vm91, %v211, 0
  %v283 = vsel %vm91, %v216, 0
  %v286 = vsel %vm91, %v225, 0
  %v289 = vsel %vm91, %v230, 0
  %v292 = vsel %vm91, %v235, 0
  %v295 = vsel %vm91, %v240, 0
  %v298 = vsel %vm91, %v245, 0
  %v301 = vsel %vm91, %v250, 0
  %v304 = vsel %vm91, %v255, 0
  %v307 = vsel %vm91, %v260, 0
  %309 = vmatprep.subr.mxu0 0.0
  %310 = vmatpush1.msra.mxu0 0.0
  %311 = vmatprep.subr.mxu0 0.0
  %312 = vmatpush1.msra.mxu0 0.0
  %313 = vmatprep.subr.mxu0 0.0
  %314 = vmatpush1.msra.mxu0 0.0
  %315 = vmatprep.subr.mxu0 0.0
  %316 = vmatpush1.msra.mxu0 0.0
  %317 = vmatprep.subr.mxu0 0.0
  %318 = vmatpush1.msra.mxu0 0.0
  %319 = vmatprep.subr.mxu0 0.0
  %320 = vmatpush1.msra.mxu0 0.0
  %321 = vmatprep.subr.mxu0 0.0
  %322 = vmatpush1.msra.mxu0 0.0
  %323 = vmatprep.subr.mxu0 0.0
  %324 = vmatpush1.msra.mxu0 0.0
  %325 = vmatprep.subr.mxu0 0.0
  %326 = vmatpush1.msra.mxu0 0.0
  %327 = vmatprep.subr.mxu0 0.0
  %328 = vmatpush1.msra.mxu0 0.0
  %329 = vmatprep.subr.mxu0 0.0
  %330 = vmatpush1.msra.mxu0 0.0
  %331 = vmatprep.subr.mxu0 0.0
  %332 = vmatpush1.msra.mxu0 0.0
  %333 = vmatprep.subr.mxu0 0.0
  %334 = vmatpush1.msra.mxu0 0.0
  %335 = vmatprep.subr.mxu0 0.0
  %336 = vmatpush1.msra.mxu0 0.0
  %337 = vmatprep.subr.mxu0 0.0
  %338 = vmatpush1.msra.mxu0 %v16
  %339 = vmatprep.subr.mxu0 0.0
  %340 = vmatpush1.msra.mxu0 %v15
  %341 = vmatprep.subr.mxu0 0.0
  %342 = vmatpush2.msra.mxu0 0.0
  %343 = vmatprep.subr.mxu0 0.0
  %344 = vmatpush2.msra.mxu0 0.0
  %345 = vmatprep.subr.mxu0 0.0
  %346 = vmatpush2.msra.mxu0 0.0
  %347 = vmatprep.subr.mxu0 0.0
  %348 = vmatpush2.msra.mxu0 0.0
  %349 = vmatprep.subr.mxu0 0.0
  %350 = vmatpush2.msra.mxu0 0.0
  %351 = vmatprep.subr.mxu0 0.0
  %352 = vmatpush2.msra.mxu0 0.0
  %353 = vmatprep.subr.mxu0 0.0
  %354 = vmatpush2.msra.mxu0 0.0
  %355 = vmatprep.subr.mxu0 0.0
  %356 = vmatpush2.msra.mxu0 0.0
  %357 = vmatprep.subr.mxu0 0.0
  %358 = vmatpush2.msra.mxu0 0.0
  %359 = vmatprep.subr.mxu0 0.0
  %360 = vmatpush2.msra.mxu0 0.0
  %361 = vmatprep.subr.mxu0 0.0
  %362 = vmatpush2.msra.mxu0 0.0
  %363 = vmatprep.subr.mxu0 0.0
  %364 = vmatpush2.msra.mxu0 0.0
  %365 = vmatprep.subr.mxu0 0.0
  %366 = vmatpush2.msra.mxu0 0.0
  %367 = vmatprep.subr.mxu0 0.0
  %368 = vmatpush2.msra.mxu0 0.0
  %369 = vmatprep.subr.mxu0 0.0
  %370 = vmatpush2.msra.mxu0 0.0
  %371 = vmatprep.subr.mxu0 0.0
  %372 = vmatpush2.msra.mxu0 0.0
  %373 = vmatprep.mubr.f32.mxu0 0.0
  %374 = vmatmul.mubr.f32.gmra.mxu0 %v262
  %v375 = vpop.f32.mrf.mxu0
  %v376 = vadd.f32 0.0, %v375
  %v377 = vpop.f32.mrf.mxu0
  %378 = vmatprep.mubr.f32.mxu0 0.0
  %379 = vmatmul.mubr.f32.gmra.mxu0 %v265
  %v380 = vpop.f32.mrf.mxu0
  %v381 = vadd.f32 0.0, %v380
  %v382 = vpop.f32.mrf.mxu0
  %383 = vmatprep.mubr.f32.mxu0 0.0
  %384 = vmatmul.mubr.f32.gmra.mxu0 %v268
  %v385 = vpop.f32.mrf.mxu0
  %v386 = vadd.f32 0.0, %v385
  %v387 = vpop.f32.mrf.mxu0
  %388 = vmatprep.mubr.f32.mxu0 0.0
  %389 = vmatmul.mubr.f32.gmra.mxu0 %v271
  %v390 = vpop.f32.mrf.mxu0
  %v391 = vadd.f32 0.0, %v390
  %v392 = vpop.f32.mrf.mxu0
  %393 = vmatprep.mubr.f32.mxu0 0.0
  %394 = vmatmul.mubr.f32.gmra.mxu0 %v274
  %v395 = vpop.f32.mrf.mxu0
  %v396 = vadd.f32 0.0, %v395
  %v397 = vpop.f32.mrf.mxu0
  %398 = vmatprep.mubr.f32.mxu0 0.0
  %399 = vmatmul.mubr.f32.gmra.mxu0 %v277
  %v400 = vpop.f32.mrf.mxu0
  %v401 = vadd.f32 0.0, %v400
  %v402 = vpop.f32.mrf.mxu0
  %403 = vmatprep.mubr.f32.mxu0 0.0
  %404 = vmatmul.mubr.f32.gmra.mxu0 %v280
  %v405 = vpop.f32.mrf.mxu0
  %v406 = vadd.f32 0.0, %v405
  %v407 = vpop.f32.mrf.mxu0
  %408 = vmatprep.mubr.f32.mxu0 0.0
  %409 = vmatmul.mubr.f32.gmra.mxu0 %v283
  %v410 = vpop.f32.mrf.mxu0
  %v411 = vadd.f32 0.0, %v410
  %v412 = vpop.f32.mrf.mxu0
  %413 = vmatprep.mubr.f32.mxu0 0.0
  %414 = vmatmul.mubr.f32.gmra.mxu0 %v286
  %v415 = vpop.f32.mrf.mxu0
  %v416 = vadd.f32 0.0, %v415
  %v417 = vpop.f32.mrf.mxu0
  %418 = vmatprep.mubr.f32.mxu0 0.0
  %419 = vmatmul.mubr.f32.gmra.mxu0 %v289
  %v420 = vpop.f32.mrf.mxu0
  %v421 = vadd.f32 0.0, %v420
  %v422 = vpop.f32.mrf.mxu0
  %423 = vmatprep.mubr.f32.mxu0 0.0
  %424 = vmatmul.mubr.f32.gmra.mxu0 %v292
  %v425 = vpop.f32.mrf.mxu0
  %v426 = vadd.f32 0.0, %v425
  %v427 = vpop.f32.mrf.mxu0
  %428 = vmatprep.mubr.f32.mxu0 0.0
  %429 = vmatmul.mubr.f32.gmra.mxu0 %v295
  %v430 = vpop.f32.mrf.mxu0
  %v431 = vadd.f32 0.0, %v430
  %v432 = vpop.f32.mrf.mxu0
  %433 = vmatprep.mubr.f32.mxu0 0.0
  %434 = vmatmul.mubr.f32.gmra.mxu0 %v298
  %v435 = vpop.f32.mrf.mxu0
  %v436 = vadd.f32 0.0, %v435
  %v437 = vpop.f32.mrf.mxu0
  %438 = vmatprep.mubr.f32.mxu0 0.0
  %439 = vmatmul.mubr.f32.gmra.mxu0 %v301
  %v440 = vpop.f32.mrf.mxu0
  %v441 = vadd.f32 0.0, %v440
  %v442 = vpop.f32.mrf.mxu0
  %443 = vmatprep.mubr.f32.mxu0 0.0
  %444 = vmatmul.mubr.f32.gmra.mxu0 %v304
  %v445 = vpop.f32.mrf.mxu0
  %v446 = vadd.f32 0.0, %v445
  %v447 = vpop.f32.mrf.mxu0
  %448 = vmatprep.mubr.f32.mxu0 0.0
  %449 = vmatmul.mubr.f32.gmra.mxu0 %v307
  %v450 = vpop.f32.mrf.mxu0
  %v451 = vadd.f32 0.0, %v450
  %v452 = vpop.f32.mrf.mxu0
  %453 = vdwg.mxu0
  %vm454 = vcmask 64512
  %v455 = vsel %vm454, %v376, -inf
  %v456 = vrot.slane %v455, 4
  %v457 = vmax.f32 %v455, %v456
  %v458 = vrot.slane %v457, 2
  %v459 = vmax.f32 %v457, %v458
  %v460 = vrot.slane %v459, 1
  %v461 = vmax.f32 %v459, %v460
  %v462 = vsel %vm454, %v381, -inf
  %v463 = vrot.slane %v462, 4
  %v464 = vmax.f32 %v462, %v463
  %v465 = vrot.slane %v464, 2
  %v466 = vmax.f32 %v464, %v465
  %v467 = vrot.slane %v466, 1
  %v468 = vmax.f32 %v466, %v467
  %v469 = vsel %vm454, %v386, -inf
  %v470 = vrot.slane %v469, 4
  %v471 = vmax.f32 %v469, %v470
  %v472 = vrot.slane %v471, 2
  %v473 = vmax.f32 %v471, %v472
  %v474 = vrot.slane %v473, 1
  %v475 = vmax.f32 %v473, %v474
  %v476 = vsel %vm454, %v391, -inf
  %v477 = vrot.slane %v476, 4
  %v478 = vmax.f32 %v476, %v477
  %v479 = vrot.slane %v478, 2
  %v480 = vmax.f32 %v478, %v479
  %v481 = vrot.slane %v480, 1
  %v482 = vmax.f32 %v480, %v481
  %v483 = vsel %vm454, %v396, -inf
  %v484 = vrot.slane %v483, 4
  %v485 = vmax.f32 %v483, %v484
  %v486 = vrot.slane %v485, 2
  %v487 = vmax.f32 %v485, %v486
  %v488 = vrot.slane %v487, 1
  %v489 = vmax.f32 %v487, %v488
  %v490 = vsel %vm454, %v401, -inf
  %v491 = vrot.slane %v490, 4
  %v492 = vmax.f32 %v490, %v491
  %v493 = vrot.slane %v492, 2
  %v494 = vmax.f32 %v492, %v493
  %v495 = vrot.slane %v494, 1
  %v496 = vmax.f32 %v494, %v495
  %v497 = vsel %vm454, %v406, -inf
  %v498 = vrot.slane %v497, 4
  %v499 = vmax.f32 %v497, %v498
  %v500 = vrot.slane %v499, 2
  %v501 = vmax.f32 %v499, %v500
  %v502 = vrot.slane %v501, 1
  %v503 = vmax.f32 %v501, %v502
  %v504 = vsel %vm454, %v411, -inf
  %v505 = vrot.slane %v504, 4
  %v506 = vmax.f32 %v504, %v505
  %v507 = vrot.slane %v506, 2
  %v508 = vmax.f32 %v506, %v507
  %v509 = vrot.slane %v508, 1
  %v510 = vmax.f32 %v508, %v509
  %v511 = vsel %vm454, %v416, -inf
  %v512 = vrot.slane %v511, 4
  %v513 = vmax.f32 %v511, %v512
  %v514 = vrot.slane %v513, 2
  %v515 = vmax.f32 %v513, %v514
  %v516 = vrot.slane %v515, 1
  %v517 = vmax.f32 %v515, %v516
  %v518 = vsel %vm454, %v421, -inf
  %v519 = vrot.slane %v518, 4
  %v520 = vmax.f32 %v518, %v519
  %v521 = vrot.slane %v520, 2
  %v522 = vmax.f32 %v520, %v521
  %v523 = vrot.slane %v522, 1
  %v524 = vmax.f32 %v522, %v523
  %v525 = vsel %vm454, %v426, -inf
  %v526 = vrot.slane %v525, 4
  %v527 = vmax.f32 %v525, %v526
  %v528 = vrot.slane %v527, 2
  %v529 = vmax.f32 %v527, %v528
  %v530 = vrot.slane %v529, 1
  %v531 = vmax.f32 %v529, %v530
  %v532 = vsel %vm454, %v431, -inf
  %v533 = vrot.slane %v532, 4
  %v534 = vmax.f32 %v532, %v533
  %v535 = vrot.slane %v534, 2
  %v536 = vmax.f32 %v534, %v535
  %v537 = vrot.slane %v536, 1
  %v538 = vmax.f32 %v536, %v537
  %v539 = vsel %vm454, %v436, -inf
  %v540 = vrot.slane %v539, 4
  %v541 = vmax.f32 %v539, %v540
  %v542 = vrot.slane %v541, 2
  %v543 = vmax.f32 %v541, %v542
  %v544 = vrot.slane %v543, 1
  %v545 = vmax.f32 %v543, %v544
  %v546 = vsel %vm454, %v441, -inf
  %v547 = vrot.slane %v546, 4
  %v548 = vmax.f32 %v546, %v547
  %v549 = vrot.slane %v548, 2
  %v550 = vmax.f32 %v548, %v549
  %v551 = vrot.slane %v550, 1
  %v552 = vmax.f32 %v550, %v551
  %v553 = vsel %vm454, %v446, -inf
  %v554 = vrot.slane %v553, 4
  %v555 = vmax.f32 %v553, %v554
  %v556 = vrot.slane %v555, 2
  %v557 = vmax.f32 %v555, %v556
  %v558 = vrot.slane %v557, 1
  %v559 = vmax.f32 %v557, %v558
  %v560 = vsel %vm454, %v451, -inf
  %v561 = vrot.slane %v560, 4
  %v562 = vmax.f32 %v560, %v561
  %v563 = vrot.slane %v562, 2
  %v564 = vmax.f32 %v562, %v563
  %v565 = vrot.slane %v564, 1
  %v566 = vmax.f32 %v564, %v565
  %v567 = vsub.f32 %v376, %v461
  %v568 = vsub.f32 %v381, %v468
  %v569 = vsub.f32 %v386, %v475
  %v570 = vsub.f32 %v391, %v482
  %v571 = vsub.f32 %v396, %v489
  %v572 = vsub.f32 %v401, %v496
  %v573 = vsub.f32 %v406, %v503
  %v574 = vsub.f32 %v411, %v510
  %v575 = vsub.f32 %v416, %v517
  %v576 = vsub.f32 %v421, %v524
  %v577 = vsub.f32 %v426, %v531
  %v578 = vsub.f32 %v431, %v538
  %v579 = vsub.f32 %v436, %v545
  %v580 = vsub.f32 %v441, %v552
  %v581 = vsub.f32 %v446, %v559
  %v582 = vsub.f32 %v451, %v566
  %v583 = vmul.f32 %v567, 1.442695
  %v584 = vpow.pop %v583
  %v585 = vmul.f32 %v568, 1.442695
  %v586 = vpow.pop %v585
  %v587 = vmul.f32 %v569, 1.442695
  %v588 = vpow.pop %v587
  %v589 = vmul.f32 %v570, 1.442695
  %v590 = vpow.pop %v589
  %v591 = vmul.f32 %v571, 1.442695
  %v592 = vpow.pop %v591
  %v593 = vmul.f32 %v572, 1.442695
  %v594 = vpow.pop %v593
  %v595 = vmul.f32 %v573, 1.442695
  %v596 = vpow.pop %v595
  %v597 = vmul.f32 %v574, 1.442695
  %v598 = vpow.pop %v597
  %v599 = vmul.f32 %v575, 1.442695
  %v600 = vpow.pop %v599
  %v601 = vmul.f32 %v576, 1.442695
  %v602 = vpow.pop %v601
  %v603 = vmul.f32 %v577, 1.442695
  %v604 = vpow.pop %v603
  %v605 = vmul.f32 %v578, 1.442695
  %v606 = vpow.pop %v605
  %v607 = vmul.f32 %v579, 1.442695
  %v608 = vpow.pop %v607
  %v609 = vmul.f32 %v580, 1.442695
  %v610 = vpow.pop %v609
  %v611 = vmul.f32 %v581, 1.442695
  %v612 = vpow.pop %v611
  %v613 = vmul.f32 %v582, 1.442695
  %v614 = vpow.pop %v613
  %v615 = vsel %vm454, %v584, 0.0
  %v616 = vrot.slane %v615, 4
  %v617 = vadd.f32 %v615, %v616
  %v618 = vrot.slane %v617, 2
  %v619 = vadd.f32 %v617, %v618
  %v620 = vrot.slane %v619, 1
  %v621 = vadd.f32 %v619, %v620
  %v622 = vsel %vm454, %v586, 0.0
  %v623 = vrot.slane %v622, 4
  %v624 = vadd.f32 %v622, %v623
  %v625 = vrot.slane %v624, 2
  %v626 = vadd.f32 %v624, %v625
  %v627 = vrot.slane %v626, 1
  %v628 = vadd.f32 %v626, %v627
  %v629 = vsel %vm454, %v588, 0.0
  %v630 = vrot.slane %v629, 4
  %v631 = vadd.f32 %v629, %v630
  %v632 = vrot.slane %v631, 2
  %v633 = vadd.f32 %v631, %v632
  %v634 = vrot.slane %v633, 1
  %v635 = vadd.f32 %v633, %v634
  %v636 = vsel %vm454, %v590, 0.0
  %v637 = vrot.slane %v636, 4
  %v638 = vadd.f32 %v636, %v637
  %v639 = vrot.slane %v638, 2
  %v640 = vadd.f32 %v638, %v639
  %v641 = vrot.slane %v640, 1
  %v642 = vadd.f32 %v640, %v641
  %v643 = vsel %vm454, %v592, 0.0
  %v644 = vrot.slane %v643, 4
  %v645 = vadd.f32 %v643, %v644
  %v646 = vrot.slane %v645, 2
  %v647 = vadd.f32 %v645, %v646
  %v648 = vrot.slane %v647, 1
  %v649 = vadd.f32 %v647, %v648
  %v650 = vsel %vm454, %v594, 0.0
  %v651 = vrot.slane %v650, 4
  %v652 = vadd.f32 %v650, %v651
  %v653 = vrot.slane %v652, 2
  %v654 = vadd.f32 %v652, %v653
  %v655 = vrot.slane %v654, 1
  %v656 = vadd.f32 %v654, %v655
  %v657 = vsel %vm454, %v596, 0.0
  %v658 = vrot.slane %v657, 4
  %v659 = vadd.f32 %v657, %v658
  %v660 = vrot.slane %v659, 2
  %v661 = vadd.f32 %v659, %v660
  %v662 = vrot.slane %v661, 1
  %v663 = vadd.f32 %v661, %v662
  %v664 = vsel %vm454, %v598, 0.0
  %v665 = vrot.slane %v664, 4
  %v666 = vadd.f32 %v664, %v665
  %v667 = vrot.slane %v666, 2
  %v668 = vadd.f32 %v666, %v667
  %v669 = vrot.slane %v668, 1
  %v670 = vadd.f32 %v668, %v669
  %v671 = vsel %vm454, %v600, 0.0
  %v672 = vrot.slane %v671, 4
  %v673 = vadd.f32 %v671, %v672
  %v674 = vrot.slane %v673, 2
  %v675 = vadd.f32 %v673, %v674
  %v676 = vrot.slane %v675, 1
  %v677 = vadd.f32 %v675, %v676
  %v678 = vsel %vm454, %v602, 0.0
  %v679 = vrot.slane %v678, 4
  %v680 = vadd.f32 %v678, %v679
  %v681 = vrot.slane %v680, 2
  %v682 = vadd.f32 %v680, %v681
  %v683 = vrot.slane %v682, 1
  %v684 = vadd.f32 %v682, %v683
  %v685 = vsel %vm454, %v604, 0.0
  %v686 = vrot.slane %v685, 4
  %v687 = vadd.f32 %v685, %v686
  %v688 = vrot.slane %v687, 2
  %v689 = vadd.f32 %v687, %v688
  %v690 = vrot.slane %v689, 1
  %v691 = vadd.f32 %v689, %v690
  %v692 = vsel %vm454, %v606, 0.0
  %v693 = vrot.slane %v692, 4
  %v694 = vadd.f32 %v692, %v693
  %v695 = vrot.slane %v694, 2
  %v696 = vadd.f32 %v694, %v695
  %v697 = vrot.slane %v696, 1
  %v698 = vadd.f32 %v696, %v697
  %v699 = vsel %vm454, %v608, 0.0
  %v700 = vrot.slane %v699, 4
  %v701 = vadd.f32 %v699, %v700
  %v702 = vrot.slane %v701, 2
  %v703 = vadd.f32 %v701, %v702
  %v704 = vrot.slane %v703, 1
  %v705 = vadd.f32 %v703, %v704
  %v706 = vsel %vm454, %v610, 0.0
  %v707 = vrot.slane %v706, 4
  %v708 = vadd.f32 %v706, %v707
  %v709 = vrot.slane %v708, 2
  %v710 = vadd.f32 %v708, %v709
  %v711 = vrot.slane %v710, 1
  %v712 = vadd.f32 %v710, %v711
  %v713 = vsel %vm454, %v612, 0.0
  %v714 = vrot.slane %v713, 4
  %v715 = vadd.f32 %v713, %v714
  %v716 = vrot.slane %v715, 2
  %v717 = vadd.f32 %v715, %v716
  %v718 = vrot.slane %v717, 1
  %v719 = vadd.f32 %v717, %v718
  %v720 = vsel %vm454, %v614, 0.0
  %v721 = vrot.slane %v720, 4
  %v722 = vadd.f32 %v720, %v721
  %v723 = vrot.slane %v722, 2
  %v724 = vadd.f32 %v722, %v723
  %v725 = vrot.slane %v724, 1
  %v726 = vadd.f32 %v724, %v725
  %v727 = vrcp.pop %v621
  %v728 = vrcp.pop %v628
  %v729 = vrcp.pop %v635
  %v730 = vrcp.pop %v642
  %v731 = vrcp.pop %v649
  %v732 = vrcp.pop %v656
  %v733 = vrcp.pop %v663
  %v734 = vrcp.pop %v670
  %v735 = vrcp.pop %v677
  %v736 = vrcp.pop %v684
  %v737 = vrcp.pop %v691
  %v738 = vrcp.pop %v698
  %v739 = vrcp.pop %v705
  %v740 = vrcp.pop %v712
  %v741 = vrcp.pop %v719
  %v742 = vrcp.pop %v726
  %v743 = vmul.f32 %v584, %v727
  %v744 = vmul.f32 %v586, %v728
  %v745 = vmul.f32 %v588, %v729
  %v746 = vmul.f32 %v590, %v730
  %v747 = vmul.f32 %v592, %v731
  %v748 = vmul.f32 %v594, %v732
  %v749 = vmul.f32 %v596, %v733
  %v750 = vmul.f32 %v598, %v734
  %v751 = vmul.f32 %v600, %v735
  %v752 = vmul.f32 %v602, %v736
  %v753 = vmul.f32 %v604, %v737
  %v754 = vmul.f32 %v606, %v738
  %v755 = vmul.f32 %v608, %v739
  %v756 = vmul.f32 %v610, %v740
  %v757 = vmul.f32 %v612, %v741
  %v758 = vmul.f32 %v614, %v742
  %v760 = vsel %vm454, %v743, 0
  %v763 = vsel %vm454, %v744, 0
  %v766 = vsel %vm454, %v745, 0
  %v769 = vsel %vm454, %v746, 0
  %v772 = vsel %vm454, %v747, 0
  %v775 = vsel %vm454, %v748, 0
  %v778 = vsel %vm454, %v749, 0
  %v781 = vsel %vm454, %v750, 0
  %v784 = vsel %vm454, %v751, 0
  %v787 = vsel %vm454, %v752, 0
  %v790 = vsel %vm454, %v753, 0
  %v793 = vsel %vm454, %v754, 0
  %v796 = vsel %vm454, %v755, 0
  %v799 = vsel %vm454, %v756, 0
  %v802 = vsel %vm454, %v757, 0
  %v805 = vsel %vm454, %v758, 0
  %807 = vmatprep.subr.mxu0 0.0
  %808 = vmatpush1.msra.mxu0 0.0
  %809 = vmatprep.subr.mxu0 0.0
  %810 = vmatpush1.msra.mxu0 0.0
  %811 = vmatprep.subr.mxu0 0.0
  %812 = vmatpush1.msra.mxu0 0.0
  %813 = vmatprep.subr.mxu0 0.0
  %814 = vmatpush1.msra.mxu0 0.0
  %815 = vmatprep.subr.mxu0 0.0
  %816 = vmatpush1.msra.mxu0 0.0
  %817 = vmatprep.subr.mxu0 0.0
  %818 = vmatpush1.msra.mxu0 0.0
  %819 = vmatprep.subr.mxu0 0.0
  %820 = vmatpush1.msra.mxu0 0.0
  %821 = vmatprep.subr.mxu0 0.0
  %822 = vmatpush1.msra.mxu0 0.0
  %823 = vmatprep.subr.mxu0 0.0
  %824 = vmatpush1.msra.mxu0 0.0
  %825 = vmatprep.subr.mxu0 0.0
  %826 = vmatpush1.msra.mxu0 0.0
  %827 = vmatprep.subr.mxu0 0.0
  %828 = vmatpush1.msra.mxu0 0.0
  %829 = vmatprep.subr.mxu0 0.0
  %830 = vmatpush1.msra.mxu0 0.0
  %831 = vmatprep.subr.mxu0 0.0
  %832 = vmatpush1.msra.mxu0 0.0
  %833 = vmatprep.subr.mxu0 0.0
  %834 = vmatpush1.msra.mxu0 0.0
  %835 = vmatprep.subr.mxu0 0.0
  %836 = vmatpush1.msra.mxu0 0.0
  %837 = vmatprep.subr.mxu0 0.0
  %838 = vmatpush1.msra.mxu0 %v17
  %839 = vmatprep.subr.mxu0 0.0
  %840 = vmatpush2.msra.mxu0 0.0
  %841 = vmatprep.subr.mxu0 0.0
  %842 = vmatpush2.msra.mxu0 0.0
  %843 = vmatprep.subr.mxu0 0.0
  %844 = vmatpush2.msra.mxu0 0.0
  %845 = vmatprep.subr.mxu0 0.0
  %846 = vmatpush2.msra.mxu0 0.0
  %847 = vmatprep.subr.mxu0 0.0
  %848 = vmatpush2.msra.mxu0 0.0
  %849 = vmatprep.subr.mxu0 0.0
  %850 = vmatpush2.msra.mxu0 0.0
  %851 = vmatprep.subr.mxu0 0.0
  %852 = vmatpush2.msra.mxu0 0.0
  %853 = vmatprep.subr.mxu0 0.0
  %854 = vmatpush2.msra.mxu0 0.0
  %855 = vmatprep.subr.mxu0 0.0
  %856 = vmatpush2.msra.mxu0 0.0
  %857 = vmatprep.subr.mxu0 0.0
  %858 = vmatpush2.msra.mxu0 0.0
  %859 = vmatprep.subr.mxu0 0.0
  %860 = vmatpush2.msra.mxu0 0.0
  %861 = vmatprep.subr.mxu0 0.0
  %862 = vmatpush2.msra.mxu0 0.0
  %863 = vmatprep.subr.mxu0 0.0
  %864 = vmatpush2.msra.mxu0 0.0
  %865 = vmatprep.subr.mxu0 0.0
  %866 = vmatpush2.msra.mxu0 0.0
  %867 = vmatprep.subr.mxu0 0.0
  %868 = vmatpush2.msra.mxu0 0.0
  %869 = vmatprep.subr.mxu0 0.0
  %870 = vmatpush2.msra.mxu0 0.0
  %871 = vmatprep.mubr.f32.mxu0 0.0
  %872 = vmatmul.mubr.f32.gmra.mxu0 %v760
  %v873 = vpop.f32.mrf.mxu0
  %v874 = vadd.f32 0.0, %v873
  %v875 = vpop.f32.mrf.mxu0
  %876 = vmatprep.mubr.f32.mxu0 0.0
  %877 = vmatmul.mubr.f32.gmra.mxu0 %v763
  %v878 = vpop.f32.mrf.mxu0
  %v879 = vadd.f32 0.0, %v878
  %v880 = vpop.f32.mrf.mxu0
  %881 = vmatprep.mubr.f32.mxu0 0.0
  %882 = vmatmul.mubr.f32.gmra.mxu0 %v766
  %v883 = vpop.f32.mrf.mxu0
  %v884 = vadd.f32 0.0, %v883
  %v885 = vpop.f32.mrf.mxu0
  %886 = vmatprep.mubr.f32.mxu0 0.0
  %887 = vmatmul.mubr.f32.gmra.mxu0 %v769
  %v888 = vpop.f32.mrf.mxu0
  %v889 = vadd.f32 0.0, %v888
  %v890 = vpop.f32.mrf.mxu0
  %891 = vmatprep.mubr.f32.mxu0 0.0
  %892 = vmatmul.mubr.f32.gmra.mxu0 %v772
  %v893 = vpop.f32.mrf.mxu0
  %v894 = vadd.f32 0.0, %v893
  %v895 = vpop.f32.mrf.mxu0
  %896 = vmatprep.mubr.f32.mxu0 0.0
  %897 = vmatmul.mubr.f32.gmra.mxu0 %v775
  %v898 = vpop.f32.mrf.mxu0
  %v899 = vadd.f32 0.0, %v898
  %v900 = vpop.f32.mrf.mxu0
  %901 = vmatprep.mubr.f32.mxu0 0.0
  %902 = vmatmul.mubr.f32.gmra.mxu0 %v778
  %v903 = vpop.f32.mrf.mxu0
  %v904 = vadd.f32 0.0, %v903
  %v905 = vpop.f32.mrf.mxu0
  %906 = vmatprep.mubr.f32.mxu0 0.0
  %907 = vmatmul.mubr.f32.gmra.mxu0 %v781
  %v908 = vpop.f32.mrf.mxu0
  %v909 = vadd.f32 0.0, %v908
  %v910 = vpop.f32.mrf.mxu0
  %911 = vmatprep.mubr.f32.mxu0 0.0
  %912 = vmatmul.mubr.f32.gmra.mxu0 %v784
  %v913 = vpop.f32.mrf.mxu0
  %v914 = vadd.f32 0.0, %v913
  %v915 = vpop.f32.mrf.mxu0
  %916 = vmatprep.mubr.f32.mxu0 0.0
  %917 = vmatmul.mubr.f32.gmra.mxu0 %v787
  %v918 = vpop.f32.mrf.mxu0
  %v919 = vadd.f32 0.0, %v918
  %v920 = vpop.f32.mrf.mxu0
  %921 = vmatprep.mubr.f32.mxu0 0.0
  %922 = vmatmul.mubr.f32.gmra.mxu0 %v790
  %v923 = vpop.f32.mrf.mxu0
  %v924 = vadd.f32 0.0, %v923
  %v925 = vpop.f32.mrf.mxu0
  %926 = vmatprep.mubr.f32.mxu0 0.0
  %927 = vmatmul.mubr.f32.gmra.mxu0 %v793
  %v928 = vpop.f32.mrf.mxu0
  %v929 = vadd.f32 0.0, %v928
  %v930 = vpop.f32.mrf.mxu0
  %931 = vmatprep.mubr.f32.mxu0 0.0
  %932 = vmatmul.mubr.f32.gmra.mxu0 %v796
  %v933 = vpop.f32.mrf.mxu0
  %v934 = vadd.f32 0.0, %v933
  %v935 = vpop.f32.mrf.mxu0
  %936 = vmatprep.mubr.f32.mxu0 0.0
  %937 = vmatmul.mubr.f32.gmra.mxu0 %v799
  %v938 = vpop.f32.mrf.mxu0
  %v939 = vadd.f32 0.0, %v938
  %v940 = vpop.f32.mrf.mxu0
  %941 = vmatprep.mubr.f32.mxu0 0.0
  %942 = vmatmul.mubr.f32.gmra.mxu0 %v802
  %v943 = vpop.f32.mrf.mxu0
  %v944 = vadd.f32 0.0, %v943
  %v945 = vpop.f32.mrf.mxu0
  %946 = vmatprep.mubr.f32.mxu0 0.0
  %947 = vmatmul.mubr.f32.gmra.mxu0 %v805
  %v948 = vpop.f32.mrf.mxu0
  %v949 = vadd.f32 0.0, %v948
  %v950 = vpop.f32.mrf.mxu0
  %951 = vdwg.mxu0
  %952 = vrot.lane.b32.xlu0 %v165, 96
  %v953 = vpop.permute.xlu0 %952
  %v955 = vmul.f32 %v874, %v953
  %v956 = vsel %vm91, %v955, 0.0
  %v957 = vrot.slane %v956, 4
  %v958 = vadd.f32 %v956, %v957
  %v959 = vrot.slane %v958, 2
  %v960 = vadd.f32 %v958, %v959
  %v961 = vrot.slane %v960, 1
  %v962 = vadd.f32 %v960, %v961
  %v963 = vmul.f32 %v879, %v953
  %v964 = vsel %vm91, %v963, 0.0
  %v965 = vrot.slane %v964, 4
  %v966 = vadd.f32 %v964, %v965
  %v967 = vrot.slane %v966, 2
  %v968 = vadd.f32 %v966, %v967
  %v969 = vrot.slane %v968, 1
  %v970 = vadd.f32 %v968, %v969
  %v971 = vmul.f32 %v884, %v953
  %v972 = vsel %vm91, %v971, 0.0
  %v973 = vrot.slane %v972, 4
  %v974 = vadd.f32 %v972, %v973
  %v975 = vrot.slane %v974, 2
  %v976 = vadd.f32 %v974, %v975
  %v977 = vrot.slane %v976, 1
  %v978 = vadd.f32 %v976, %v977
  %v979 = vmul.f32 %v889, %v953
  %v980 = vsel %vm91, %v979, 0.0
  %v981 = vrot.slane %v980, 4
  %v982 = vadd.f32 %v980, %v981
  %v983 = vrot.slane %v982, 2
  %v984 = vadd.f32 %v982, %v983
  %v985 = vrot.slane %v984, 1
  %v986 = vadd.f32 %v984, %v985
  %v987 = vmul.f32 %v894, %v953
  %v988 = vsel %vm91, %v987, 0.0
  %v989 = vrot.slane %v988, 4
  %v990 = vadd.f32 %v988, %v989
  %v991 = vrot.slane %v990, 2
  %v992 = vadd.f32 %v990, %v991
  %v993 = vrot.slane %v992, 1
  %v994 = vadd.f32 %v992, %v993
  %v995 = vmul.f32 %v899, %v953
  %v996 = vsel %vm91, %v995, 0.0
  %v997 = vrot.slane %v996, 4
  %v998 = vadd.f32 %v996, %v997
  %v999 = vrot.slane %v998, 2
  %v1000 = vadd.f32 %v998, %v999
  %v1001 = vrot.slane %v1000, 1
  %v1002 = vadd.f32 %v1000, %v1001
  %v1003 = vmul.f32 %v904, %v953
  %v1004 = vsel %vm91, %v1003, 0.0
  %v1005 = vrot.slane %v1004, 4
  %v1006 = vadd.f32 %v1004, %v1005
  %v1007 = vrot.slane %v1006, 2
  %v1008 = vadd.f32 %v1006, %v1007
  %v1009 = vrot.slane %v1008, 1
  %v1010 = vadd.f32 %v1008, %v1009
  %v1011 = vmul.f32 %v909, %v953
  %v1012 = vsel %vm91, %v1011, 0.0
  %v1013 = vrot.slane %v1012, 4
  %v1014 = vadd.f32 %v1012, %v1013
  %v1015 = vrot.slane %v1014, 2
  %v1016 = vadd.f32 %v1014, %v1015
  %v1017 = vrot.slane %v1016, 1
  %v1018 = vadd.f32 %v1016, %v1017
  %1019 = vrot.lane.b32.xlu0 %v170, 96
  %v1020 = vpop.permute.xlu0 %1019
  %v1022 = vmul.f32 %v914, %v1020
  %v1023 = vsel %vm91, %v1022, 0.0
  %v1024 = vrot.slane %v1023, 4
  %v1025 = vadd.f32 %v1023, %v1024
  %v1026 = vrot.slane %v1025, 2
  %v1027 = vadd.f32 %v1025, %v1026
  %v1028 = vrot.slane %v1027, 1
  %v1029 = vadd.f32 %v1027, %v1028
  %v1030 = vmul.f32 %v919, %v1020
  %v1031 = vsel %vm91, %v1030, 0.0
  %v1032 = vrot.slane %v1031, 4
  %v1033 = vadd.f32 %v1031, %v1032
  %v1034 = vrot.slane %v1033, 2
  %v1035 = vadd.f32 %v1033, %v1034
  %v1036 = vrot.slane %v1035, 1
  %v1037 = vadd.f32 %v1035, %v1036
  %v1038 = vmul.f32 %v924, %v1020
  %v1039 = vsel %vm91, %v1038, 0.0
  %v1040 = vrot.slane %v1039, 4
  %v1041 = vadd.f32 %v1039, %v1040
  %v1042 = vrot.slane %v1041, 2
  %v1043 = vadd.f32 %v1041, %v1042
  %v1044 = vrot.slane %v1043, 1
  %v1045 = vadd.f32 %v1043, %v1044
  %v1046 = vmul.f32 %v929, %v1020
  %v1047 = vsel %vm91, %v1046, 0.0
  %v1048 = vrot.slane %v1047, 4
  %v1049 = vadd.f32 %v1047, %v1048
  %v1050 = vrot.slane %v1049, 2
  %v1051 = vadd.f32 %v1049, %v1050
  %v1052 = vrot.slane %v1051, 1
  %v1053 = vadd.f32 %v1051, %v1052
  %v1054 = vmul.f32 %v934, %v1020
  %v1055 = vsel %vm91, %v1054, 0.0
  %v1056 = vrot.slane %v1055, 4
  %v1057 = vadd.f32 %v1055, %v1056
  %v1058 = vrot.slane %v1057, 2
  %v1059 = vadd.f32 %v1057, %v1058
  %v1060 = vrot.slane %v1059, 1
  %v1061 = vadd.f32 %v1059, %v1060
  %v1062 = vmul.f32 %v939, %v1020
  %v1063 = vsel %vm91, %v1062, 0.0
  %v1064 = vrot.slane %v1063, 4
  %v1065 = vadd.f32 %v1063, %v1064
  %v1066 = vrot.slane %v1065, 2
  %v1067 = vadd.f32 %v1065, %v1066
  %v1068 = vrot.slane %v1067, 1
  %v1069 = vadd.f32 %v1067, %v1068
  %v1070 = vmul.f32 %v944, %v1020
  %v1071 = vsel %vm91, %v1070, 0.0
  %v1072 = vrot.slane %v1071, 4
  %v1073 = vadd.f32 %v1071, %v1072
  %v1074 = vrot.slane %v1073, 2
  %v1075 = vadd.f32 %v1073, %v1074
  %v1076 = vrot.slane %v1075, 1
  %v1077 = vadd.f32 %v1075, %v1076
  %v1078 = vmul.f32 %v949, %v1020
  %v1079 = vsel %vm91, %v1078, 0.0
  %v1080 = vrot.slane %v1079, 4
  %v1081 = vadd.f32 %v1079, %v1080
  %v1082 = vrot.slane %v1081, 2
  %v1083 = vadd.f32 %v1081, %v1082
  %v1084 = vrot.slane %v1083, 1
  %v1085 = vadd.f32 %v1083, %v1084
  %vm1086 = vcmask 1040384
  %v1087 = vsel %vm1086, %v962, %v970
  %vm1088 = vcmask 1041408
  %v1089 = vsel %vm1088, %v1087, %v978
  %vm1090 = vcmask 1042432
  %v1091 = vsel %vm1090, %v1089, %v986
  %vm1092 = vcmask 1043456
  %v1093 = vsel %vm1092, %v1091, %v994
  %vm1094 = vcmask 1044480
  %v1095 = vsel %vm1094, %v1093, %v1002
  %vm1096 = vcmask 1045504
  %v1097 = vsel %vm1096, %v1095, %v1010
  %vm1098 = vcmask 1046528
  %v1099 = vsel %vm1098, %v1097, %v1018
  %v1100 = vsel %vm1086, %v1029, %v1037
  %v1101 = vsel %vm1088, %v1100, %v1045
  %v1102 = vsel %vm1090, %v1101, %v1053
  %v1103 = vsel %vm1092, %v1102, %v1061
  %v1104 = vsel %vm1094, %v1103, %v1069
  %v1105 = vsel %vm1096, %v1104, %v1077
  %v1106 = vsel %vm1098, %v1105, %v1085
  %v1107 = vlaneseq
  %v1108 = vshrl.u32 %v1107, 7
  %v1109 = vsub.s32 1, %v1108
  %v1110 = vrot.slane %v18, %v1109
  %v1112 = vsel %vm91, %v1099, 0
  %v1115 = vsel %vm91, %v1106, 0
  %1117 = vmatprep.subr.mxu0 0.0
  %1118 = vmatpush1.msra.mxu0 0.0
  %1119 = vmatprep.subr.mxu0 0.0
  %1120 = vmatpush1.msra.mxu0 0.0
  %1121 = vmatprep.subr.mxu0 0.0
  %1122 = vmatpush1.msra.mxu0 0.0
  %1123 = vmatprep.subr.mxu0 0.0
  %1124 = vmatpush1.msra.mxu0 0.0
  %1125 = vmatprep.subr.mxu0 0.0
  %1126 = vmatpush1.msra.mxu0 0.0
  %1127 = vmatprep.subr.mxu0 0.0
  %1128 = vmatpush1.msra.mxu0 0.0
  %1129 = vmatprep.subr.mxu0 0.0
  %1130 = vmatpush1.msra.mxu0 0.0
  %1131 = vmatprep.subr.mxu0 0.0
  %1132 = vmatpush1.msra.mxu0 0.0
  %1133 = vmatprep.subr.mxu0 0.0
  %1134 = vmatpush1.msra.mxu0 0.0
  %1135 = vmatprep.subr.mxu0 0.0
  %1136 = vmatpush1.msra.mxu0 0.0
  %1137 = vmatprep.subr.mxu0 0.0
  %1138 = vmatpush1.msra.mxu0 0.0
  %1139 = vmatprep.subr.mxu0 0.0
  %1140 = vmatpush1.msra.mxu0 0.0
  %1141 = vmatprep.subr.mxu0 0.0
  %1142 = vmatpush1.msra.mxu0 0.0
  %1143 = vmatprep.subr.mxu0 0.0
  %1144 = vmatpush1.msra.mxu0 0.0
  %1145 = vmatprep.subr.mxu0 0.0
  %1146 = vmatpush1.msra.mxu0 %v14
  %1147 = vmatprep.subr.mxu0 0.0
  %1148 = vmatpush1.msra.mxu0 %v13
  %1149 = vmatprep.subr.mxu0 0.0
  %1150 = vmatpush2.msra.mxu0 0.0
  %1151 = vmatprep.subr.mxu0 0.0
  %1152 = vmatpush2.msra.mxu0 0.0
  %1153 = vmatprep.subr.mxu0 0.0
  %1154 = vmatpush2.msra.mxu0 0.0
  %1155 = vmatprep.subr.mxu0 0.0
  %1156 = vmatpush2.msra.mxu0 0.0
  %1157 = vmatprep.subr.mxu0 0.0
  %1158 = vmatpush2.msra.mxu0 0.0
  %1159 = vmatprep.subr.mxu0 0.0
  %1160 = vmatpush2.msra.mxu0 0.0
  %1161 = vmatprep.subr.mxu0 0.0
  %1162 = vmatpush2.msra.mxu0 0.0
  %1163 = vmatprep.subr.mxu0 0.0
  %1164 = vmatpush2.msra.mxu0 0.0
  %1165 = vmatprep.subr.mxu0 0.0
  %1166 = vmatpush2.msra.mxu0 0.0
  %1167 = vmatprep.subr.mxu0 0.0
  %1168 = vmatpush2.msra.mxu0 0.0
  %1169 = vmatprep.subr.mxu0 0.0
  %1170 = vmatpush2.msra.mxu0 0.0
  %1171 = vmatprep.subr.mxu0 0.0
  %1172 = vmatpush2.msra.mxu0 0.0
  %1173 = vmatprep.subr.mxu0 0.0
  %1174 = vmatpush2.msra.mxu0 0.0
  %1175 = vmatprep.subr.mxu0 0.0
  %1176 = vmatpush2.msra.mxu0 0.0
  %1177 = vmatprep.subr.mxu0 0.0
  %1178 = vmatpush2.msra.mxu0 0.0
  %1179 = vmatprep.subr.mxu0 0.0
  %1180 = vmatpush2.msra.mxu0 0.0
  %1181 = vmatprep.mubr.f32.mxu0 0.0
  %1182 = vmatmul.mubr.f32.gmra.mxu0 %v1112
  %v1183 = vpop.f32.mrf.mxu0
  %v1184 = vadd.f32 %v1110, %v1183
  %v1185 = vpop.f32.mrf.mxu0
  %1186 = vmatprep.mubr.f32.mxu0 0.0
  %1187 = vmatmul.mubr.f32.gmra.mxu0 %v1115
  %v1188 = vpop.f32.mrf.mxu0
  %v1189 = vadd.f32 %v1110, %v1188
  %v1190 = vpop.f32.mrf.mxu0
  %1191 = vdwg.mxu0
  %v1192 = vadd.f32 %v39, %v1184
  %v1193 = vadd.f32 %v71, %v1189
  %v1194 = vsel %vm91, %v1192, 0.0
  %1195 = vadd.xlane.f32.xlu0 %v1194
  %v1196 = vpop.xlane.xlu0 %1195
  %v1197 = vsel %vm91, %v1193, 0.0
  %1198 = vadd.xlane.f32.xlu0 %v1197
  %v1199 = vpop.xlane.xlu0 %1198
  %v1200 = vrcp.pop 16.0
  %v1201 = vmul.f32 %v1196, %v1200
  %v1202 = vmul.f32 %v1199, %v1200
  %v1203 = vsub.f32 %v1192, %v1201
  %v1204 = vsub.f32 %v1193, %v1202
  %v1205 = vmul.f32 %v1203, %v1203
  %v1206 = vmul.f32 %v1204, %v1204
  %v1207 = vsel %vm91, %v1205, 0.0
  %1208 = vadd.xlane.f32.xlu0 %v1207
  %v1209 = vpop.xlane.xlu0 %1208
  %v1210 = vsel %vm91, %v1206, 0.0
  %1211 = vadd.xlane.f32.xlu0 %v1210
  %v1212 = vpop.xlane.xlu0 %1211
  %v1213 = vmul.f32 %v1209, %v1200
  %v1214 = vmul.f32 %v1212, %v1200
  %v1215 = vadd.f32 %v1213, 1e-05
  %v1216 = vadd.f32 %v1214, 1e-05
  %v1217 = vrsqrt.pop %v1215
  %v1218 = vrsqrt.pop %v1216
  %v1219 = vmul.f32 %v1203, %v1217
  %v1220 = vmul.f32 %v1204, %v1218
  %v1221 = vlaneseq
  %v1222 = vshrl.u32 %v1221, 7
  %v1223 = vsub.s32 2, %v1222
  %v1224 = vrot.slane %v18, %v1223
  %v1225 = vmul.f32 %v1219, %v1224
  %v1226 = vmul.f32 %v1220, %v1224
  %v1227 = vlaneseq
  %v1228 = vshrl.u32 %v1227, 7
  %v1229 = vsub.s32 3, %v1228
  %v1230 = vrot.slane %v18, %v1229
  %v1231 = vadd.f32 %v1225, %v1230
  %v1232 = vadd.f32 %v1226, %v1230
  %1233 = vxpose.xlu0.b32.start [1/16] %v1231, 128
  %1234 = vxpose.xlu0.b32.cont [2/16] 0.0, 128
  %1235 = vxpose.xlu0.b32.cont [3/16] 0.0, 128
  %1236 = vxpose.xlu0.b32.cont [4/16] 0.0, 128
  %1237 = vxpose.xlu0.b32.cont [5/16] 0.0, 128
  %1238 = vxpose.xlu0.b32.cont [6/16] 0.0, 128
  %1239 = vxpose.xlu0.b32.cont [7/16] 0.0, 128
  %1240 = vxpose.xlu0.b32.cont [8/16] 0.0, 128
  %1241 = vxpose.xlu0.b32.cont [9/16] 0.0, 128
  %1242 = vxpose.xlu0.b32.cont [10/16] 0.0, 128
  %1243 = vxpose.xlu0.b32.cont [11/16] 0.0, 128
  %1244 = vxpose.xlu0.b32.cont [12/16] 0.0, 128
  %1245 = vxpose.xlu0.b32.cont [13/16] 0.0, 128
  %1246 = vxpose.xlu0.b32.cont [14/16] 0.0, 128
  %1247 = vxpose.xlu0.b32.cont [15/16] 0.0, 128
  %1248 = vxpose.xlu0.b32.end [16/16] 0.0, 128
  %v1249 = vpop.trf.xlu0
  %v1250 = vpop.trf.xlu0
  %v1251 = vpop.trf.xlu0
  %v1252 = vpop.trf.xlu0
  %v1253 = vpop.trf.xlu0
  %v1254 = vpop.trf.xlu0
  %v1255 = vpop.trf.xlu0
  %v1256 = vpop.trf.xlu0
  %v1257 = vpop.trf.xlu0
  %v1258 = vpop.trf.xlu0
  %v1259 = vpop.trf.xlu0
  %v1260 = vpop.trf.xlu0
  %v1261 = vpop.trf.xlu0
  %v1262 = vpop.trf.xlu0
  %v1263 = vpop.trf.xlu0
  %v1264 = vpop.trf.xlu0
  %1265 = vxpose.xlu0.b32.start [1/16] %v1232, 128
  %1266 = vxpose.xlu0.b32.cont [2/16] 0.0, 128
  %1267 = vxpose.xlu0.b32.cont [3/16] 0.0, 128
  %1268 = vxpose.xlu0.b32.cont [4/16] 0.0, 128
  %1269 = vxpose.xlu0.b32.cont [5/16] 0.0, 128
  %1270 = vxpose.xlu0.b32.cont [6/16] 0.0, 128
  %1271 = vxpose.xlu0.b32.cont [7/16] 0.0, 128
  %1272 = vxpose.xlu0.b32.cont [8/16] 0.0, 128
  %1273 = vxpose.xlu0.b32.cont [9/16] 0.0, 128
  %1274 = vxpose.xlu0.b32.cont [10/16] 0.0, 128
  %1275 = vxpose.xlu0.b32.cont [11/16] 0.0, 128
  %1276 = vxpose.xlu0.b32.cont [12/16] 0.0, 128
  %1277 = vxpose.xlu0.b32.cont [13/16] 0.0, 128
  %1278 = vxpose.xlu0.b32.cont [14/16] 0.0, 128
  %1279 = vxpose.xlu0.b32.cont [15/16] 0.0, 128
  %1280 = vxpose.xlu0.b32.end [16/16] 0.0, 128
  %v1281 = vpop.trf.xlu0
  %v1282 = vpop.trf.xlu0
  %v1283 = vpop.trf.xlu0
  %v1284 = vpop.trf.xlu0
  %v1285 = vpop.trf.xlu0
  %v1286 = vpop.trf.xlu0
  %v1287 = vpop.trf.xlu0
  %v1288 = vpop.trf.xlu0
  %v1289 = vpop.trf.xlu0
  %v1290 = vpop.trf.xlu0
  %v1291 = vpop.trf.xlu0
  %v1292 = vpop.trf.xlu0
  %v1293 = vpop.trf.xlu0
  %v1294 = vpop.trf.xlu0
  %v1295 = vpop.trf.xlu0
  %v1296 = vpop.trf.xlu0
  %1297 = vst.msk [vmem:[%s2] sm:$0xff] %vm454, %v1249
  %1298 = vst.msk [vmem:[%s2 + $0x8] sm:$0xff] %vm454, %v1250
  %1299 = vst.msk [vmem:[%s2 + $0x10] sm:$0xff] %vm454, %v1281
  %1300 = vst.msk [vmem:[%s2 + $0x18] sm:$0xff] %vm454, %v1282
  // Predicated region
  $region10: #{tpu_custom_call.1} parent=0 // pred_check
    _
  $region11: #{tpu_custom_call.1} parent=0 // pred_check_branch
    %1302 = sbr.rel (0) target = $region13
  $region12: #{tpu_custom_call.1} parent=0 // pred_region
    _
  $region13: #{tpu_custom_call.1} parent=0 // pred_fallthru
    _
  // Predicated region
  $region14: #{tpu_custom_call.1} parent=0 // pred_check
    _
  $region15: #{tpu_custom_call.1} parent=0 // pred_check_branch
    %1304 = sbr.rel (0) target = $region17
  $region16: #{tpu_custom_call.1} parent=0 // pred_region
    _
  $region17: #{tpu_custom_call.1} parent=0 // pred_fallthru
    _

</llo_original>
